<compile_context>
chip_gen: v5e
topology: v5e:2x2
jax: 0.10.0
libtpu: 0.0.40
codegen_flags: <defaults>
</compile_context>

<pallas_src>
import jax
import jax.numpy as jnp
import numpy as np
from jax.experimental import pallas as pl
from jax.experimental.pallas import tpu as pltpu

BN_EPS = 1e-5


# ------------------------------------------------------------------
# Fused kernel: deconv + pad + concat + (conv3x3 -> BN -> ReLU) x 2
# One grid step processes B_TILE images stacked along the row axis.
# ------------------------------------------------------------------
def _up_fused_kernel(x1_ref, x2_ref, rsel_ref, wup_ref, e_ref, p2_ref, ub_ref,
                     m1_ref, m2_ref, ss1_ref, ss2_ref, rm_ref, o_ref, s1, s2):
    f32 = jnp.float32
    bhp = s1.shape[0]            # B_TILE * (H2 + 2) stacked, padded slab rows
    r = bhp - 2                  # rows produced by each banded conv pass

    x1f = x1_ref[...]            # (B*H1, W1*Cin)    row-major (h, w*Cin + ci)
    x2f = x2_ref[...]            # (B*H2, W2*Chalf)  row-major (h, w*Chalf + c)

    # ---- ConvTranspose2d(k=2,s=2) + F.pad + torch.cat, all as matmuls --------------
    # Deconv reassociated: lane-spread first (small contraction), row-place second.
    u0 = jnp.dot(x1f, wup_ref[0], preferred_element_type=f32)       # (B*H1, W2*Ccat)
    u1 = jnp.dot(x1f, wup_ref[1], preferred_element_type=f32)
    t2 = jnp.dot(x2f, e_ref[...], preferred_element_type=f32)       # (B*H2, W2*Ccat)
    slab = (jnp.dot(p2_ref[...], t2, preferred_element_type=f32)    # skip connection
            + jnp.dot(rsel_ref[0], u0, preferred_element_type=f32)  # upsample, kh = 0
            + jnp.dot(rsel_ref[1], u1, preferred_element_type=f32)  # upsample, kh = 1
            + ub_ref[...])                                          # deconv bias plane
    # Pad rows of the slab are exact zeros (placement matrices have zero rows there,
    # the bias plane is zero there) -> no scratch zeroing needed for s1 at all.
    s1[...] = slab

    # ---- conv1 3x3 (pad=1) + BN + ReLU: 3 banded matmuls over the stacked slab ------
    a = jnp.dot(s1[0:r, :], m1_ref[0], preferred_element_type=f32)
    a = a + jnp.dot(s1[1:r + 1, :], m1_ref[1], preferred_element_type=f32)
    a = a + jnp.dot(s1[2:r + 2, :], m1_ref[2], preferred_element_type=f32)
    # BN + ReLU, then kill the junk rows at per-image seams so they land as zero
    # padding rows for conv2.
    a1 = jnp.maximum(a * ss1_ref[0:1, :] + ss1_ref[1:2, :], 0.0) * rm_ref[...]

    # Only the two outermost border rows of s2 need explicit zeroing.
    s2[0:1, :] = jnp.zeros((1, s2.shape[1]), f32)
    s2[r + 1:r + 2, :] = jnp.zeros((1, s2.shape[1]), f32)
    s2[1:r + 1, :] = a1

    # ---- conv2 3x3 (pad=1) + BN + ReLU ----------------------------------------------
    b = jnp.dot(s2[0:r, :], m2_ref[0], preferred_element_type=f32)
    b = b + jnp.dot(s2[1:r + 1, :], m2_ref[1], preferred_element_type=f32)
    b = b + jnp.dot(s2[2:r + 2, :], m2_ref[2], preferred_element_type=f32)
    a2 = jnp.maximum(b * ss2_ref[0:1, :] + ss2_ref[1:2, :], 0.0)    # (r, W2*Cout)

    # Single lane-dense output store; the wrapper strips per-image seam rows and
    # does the NHWC -> NCHW permute.
    o_ref[0:r, :] = a2
    o_ref[r:r + 2, :] = jnp.zeros((2, o_ref.shape[1]), f32)


# ------------------------------------------------------------------
# Up.forward (Pallas) — NCHW in / NCHW out.
# ------------------------------------------------------------------
def up_forward(x1_nchw, x2_nchw, kp):
    N, Cin, H1, W1 = x1_nchw.shape
    N2, Chalf, H2, W2 = x2_nchw.shape
    assert N == N2
    Hp = H2 + 2
    B = kp["rsel"].shape[2] // H1            # images folded per grid step
    assert kp["rsel"].shape[1] == B * Hp
    assert N % B == 0, "batch must be divisible by the batch tile"
    Ccat = kp["wup"].shape[2] // W2
    Cmid = kp["M1"].shape[2] // W2
    Cout = kp["M2"].shape[2] // W2

    # Only wrapper glue: NCHW -> row-major (n*h, w*C+c) relayouts (+ output permute below).
    x1r = jnp.transpose(x1_nchw, (0, 2, 3, 1)).reshape(N * H1, W1 * Cin).astype(jnp.float32)
    x2r = jnp.transpose(x2_nchw, (0, 2, 3, 1)).reshape(N * H2, W2 * Chalf).astype(jnp.float32)

    grid_spec = pltpu.PrefetchScalarGridSpec(
        num_scalar_prefetch=0,
        grid=(N // B,),
        in_specs=[
            pl.BlockSpec((B * H1, W1 * Cin), lambda n: (n, 0)),          # x1 rows
            pl.BlockSpec((B * H2, W2 * Chalf), lambda n: (n, 0)),        # x2 rows
            pl.BlockSpec((2, B * Hp, B * H1), lambda n: (0, 0, 0)),      # rsel
            pl.BlockSpec((2, W1 * Cin, W2 * Ccat), lambda n: (0, 0, 0)), # wup
            pl.BlockSpec((W2 * Chalf, W2 * Ccat), lambda n: (0, 0)),     # E
            pl.BlockSpec((B * Hp, B * H2), lambda n: (0, 0)),            # P2
            pl.BlockSpec((B * Hp, W2 * Ccat), lambda n: (0, 0)),         # upbias
            pl.BlockSpec((3, W2 * Ccat, W2 * Cmid), lambda n: (0, 0, 0)),# M1
            pl.BlockSpec((3, W2 * Cmid, W2 * Cout), lambda n: (0, 0, 0)),# M2
            pl.BlockSpec((2, W2 * Cmid), lambda n: (0, 0)),              # ss1
            pl.BlockSpec((2, W2 * Cout), lambda n: (0, 0)),              # ss2
            pl.BlockSpec((B * Hp - 2, 1), lambda n: (0, 0)),             # row mask
        ],
        out_specs=pl.BlockSpec((B * Hp, W2 * Cout), lambda n: (n, 0)),
        scratch_shapes=[
            pltpu.VMEM((B * Hp, W2 * Ccat), jnp.float32),   # padded concat slab
            pltpu.VMEM((B * Hp, W2 * Cmid), jnp.float32),   # padded conv1 output slab
        ],
    )
    out = pl.pallas_call(
        _up_fused_kernel,
        out_shape=jax.ShapeDtypeStruct((N * Hp, W2 * Cout), jnp.float32),
        grid_spec=grid_spec,
        compiler_params=pltpu.CompilerParams(dimension_semantics=("parallel",)),
    )(x1r, x2r, kp["rsel"], kp["wup"], kp["E"], kp["P2"], kp["upbias"],
      kp["M1"], kp["M2"], kp["ss1"], kp["ss2"], kp["rowmask"])

    out = out.reshape(N, Hp, W2, Cout)[:, :H2]     # strip per-image seam/pad rows
    return jnp.transpose(out, (0, 3, 1, 2))        # NHWC -> NCHW


# ------------------------------------------------------------------
# Parameter setup (deterministic, synthetic).
# ------------------------------------------------------------------
def init_up_params(key, in_channels, out_channels):
    cin, chalf, cout = in_channels, in_channels // 2, out_channels
    ks = jax.random.split(key, 16)
    nrm = lambda k, s, sc=0.1: sc * jax.random.normal(k, s, jnp.float32)

    p = {}
    p["up_w"] = nrm(ks[0], (cin, chalf, 2, 2))     # ConvTranspose2d weight (Cin,Chalf,2,2)
    p["up_b"] = nrm(ks[1], (chalf,))
    p["w1"] = nrm(ks[2], (cout, cin, 3, 3))        # DoubleConv conv1
    p["b1"] = nrm(ks[3], (cout,))
    p["w2"] = nrm(ks[4], (cout, cout, 3, 3))       # DoubleConv conv2
    p["b2"] = nrm(ks[5], (cout,))
    p["g1"] = 1.0 + nrm(ks[6], (cout,))
    p["be1"] = nrm(ks[7], (cout,))
    p["m1"] = nrm(ks[8], (cout,))
    p["v1"] = 1.0 + jnp.abs(nrm(ks[9], (cout,)))
    p["g2"] = 1.0 + nrm(ks[10], (cout,))
    p["be2"] = nrm(ks[11], (cout,))
    p["m2"] = nrm(ks[12], (cout,))
    p["v2"] = 1.0 + jnp.abs(nrm(ks[13], (cout,)))
    return p


def _fold_bn(conv_bias, gamma, beta, mean, var):
    b = np.asarray(conv_bias, np.float32)
    g = np.asarray(gamma, np.float32)
    be = np.asarray(beta, np.float32)
    m = np.asarray(mean, np.float32)
    v = np.asarray(var, np.float32)
    scale = g / np.sqrt(v + BN_EPS)
    shift = (b - m) * scale + be
    return scale, shift


# ------------------------------------------------------------------
# Host-side folding of weights into placement / band matrices.
# ------------------------------------------------------------------
def prepare_kernel_params(p, H1, W1, H2, W2, b_tile):
    up_w = np.asarray(p["up_w"], np.float32)     # (Cin, Chalf, 2, 2)
    up_b = np.asarray(p["up_b"], np.float32)     # (Chalf,)
    w1 = np.asarray(p["w1"], np.float32)         # (Cmid, Ccat, 3, 3)
    w2 = np.asarray(p["w2"], np.float32)         # (Cout, Cmid, 3, 3)
    Cin, Chalf = up_w.shape[0], up_w.shape[1]
    Cmid, Ccat = w1.shape[0], w1.shape[1]
    Cout = w2.shape[0]
    assert Ccat == Chalf + Chalf == Cin
    B = b_tile
    Hp = H2 + 2
    offY = (H2 - 2 * H1) // 2
    offX = (W2 - 2 * W1) // 2
    assert offY >= 0 and offX >= 0, "x2 must be at least as large as the upsampled x1"

    # Deconv weights -> lane-spreading matrices (one per kh tap). Upsampled x1 lands at
    # channels c >= Chalf of the concat layout [w*Ccat + c] (torch.cat([x2, x1], dim=1)).
    wup = np.zeros((2, W1 * Cin, W2 * Ccat), np.float32)
    for kh in range(2):
        for kw in range(2):
            for w in range(W1):
                q = offX + 2 * w + kw
                wup[kh, w * Cin:(w + 1) * Cin,
                    q * Ccat + Chalf:q * Ccat + 2 * Chalf] = up_w[:, :, kh, kw]

    # Row-placement matrices into stacked padded-slab coordinates (image b occupies rows
    # [b*Hp, (b+1)*Hp), with rows b*Hp and b*Hp+H2+1 being zero padding).
    rsel = np.zeros((2, B * Hp, B * H1), np.float32)
    for kh in range(2):
        for b in range(B):
            for h in range(H1):
                rsel[kh, b * Hp + 1 + offY + 2 * h + kh, b * H1 + h] = 1.0

    p2 = np.zeros((B * Hp, B * H2), np.float32)
    for b in range(B):
        for h in range(H2):
            p2[b * Hp + 1 + h, b * H2 + h] = 1.0

    # x2 channel spread: skip connection goes to channels c < Chalf.
    E = np.zeros((W2 * Chalf, W2 * Ccat), np.float32)
    for w in range(W2):
        for c in range(Chalf):
            E[w * Chalf + c, w * Ccat + c] = 1.0

    # Deconv bias plane, only where the upsampled image lands.
    ub = np.zeros((B * Hp, W2 * Ccat), np.float32)
    for b in range(B):
        for rr in range(offY, offY + 2 * H1):
            for q in range(offX, offX + 2 * W1):
                ub[b * Hp + 1 + rr, q * Ccat + Chalf:q * Ccat + 2 * Chalf] = up_b

    # conv1/conv2 as three banded matrices (one per dh tap) with the horizontal zero
    # padding folded in: out-of-range dw taps at the image borders are simply dropped.
    M1 = np.zeros((3, W2 * Ccat, W2 * Cmid), np.float32)
    for dh in range(3):
        for dw in range(3):
            for w in range(W2):
                wi = w + dw - 1
                if 0 <= wi < W2:
                    M1[dh, wi * Ccat:(wi + 1) * Ccat,
                       w * Cmid:(w + 1) * Cmid] = w1[:, :, dh, dw].T

    M2 = np.zeros((3, W2 * Cmid, W2 * Cout), np.float32)
    for dh in range(3):
        for dw in range(3):
            for w in range(W2):
                wi = w + dw - 1
                if 0 <= wi < W2:
                    M2[dh, wi * Cmid:(wi + 1) * Cmid,
                       w * Cout:(w + 1) * Cout] = w2[:, :, dh, dw].T

    sc1, sh1 = _fold_bn(p["b1"], p["g1"], p["be1"], p["m1"], p["v1"])
    sc2, sh2 = _fold_bn(p["b2"], p["g2"], p["be2"], p["m2"], p["v2"])
    ss1 = np.stack([np.tile(sc1, W2), np.tile(sh1, W2)]).astype(np.float32)  # [w*Cmid+co]
    ss2 = np.stack([np.tile(sc2, W2), np.tile(sh2, W2)]).astype(np.float32)  # [w*Cout+co]

    # Row-validity mask in conv-output coordinates: zero at cross-image seam rows.
    rm = np.zeros((B * Hp - 2, 1), np.float32)
    for j in range(B * Hp - 2):
        if (j % Hp) < H2:
            rm[j, 0] = 1.0

    return dict(rsel=jnp.asarray(rsel), wup=jnp.asarray(wup), E=jnp.asarray(E),
                P2=jnp.asarray(p2), upbias=jnp.asarray(ub),
                M1=jnp.asarray(M1), M2=jnp.asarray(M2),
                ss1=jnp.asarray(ss1), ss2=jnp.asarray(ss2), rowmask=jnp.asarray(rm))


# ------------------------------------------------------------------
# Pure-JAX reference (independent implementation).
# ------------------------------------------------------------------
def _ref_conv_bn_relu(x_nhwc, w_torch, b, g, be, m, v):
    w_hwio = jnp.transpose(w_torch, (2, 3, 1, 0))
    y = jax.lax.conv_general_dilated(
        x_nhwc, w_hwio, window_strides=(1, 1), padding=((1, 1), (1, 1)),
        dimension_numbers=("NHWC", "HWIO", "NHWC"),
        precision=jax.lax.Precision.HIGHEST,
    )
    y = (y + b - m) / jnp.sqrt(v + BN_EPS) * g + be
    return jnp.maximum(y, 0.0)


def _ref_deconv(x_nhwc, w_t, b_t):
    N, H, W, Cin = x_nhwc.shape
    Cout = w_t.shape[1]
    y = jnp.einsum("nhwc,cokl->nhkwlo", x_nhwc, w_t,
                   precision=jax.lax.Precision.HIGHEST)
    return y.reshape(N, 2 * H, 2 * W, Cout) + b_t


def up_forward_ref(x1_nchw, x2_nchw, p):
    x1 = jnp.transpose(x1_nchw, (0, 2, 3, 1)).astype(jnp.float32)
    x2 = jnp.transpose(x2_nchw, (0, 2, 3, 1)).astype(jnp.float32)
    x1u = _ref_deconv(x1, p["up_w"], p["up_b"])
    diffY = x2.shape[1] - x1u.shape[1]
    diffX = x2.shape[2] - x1u.shape[2]
    x1u = jnp.pad(x1u, ((0, 0), (diffY // 2, diffY - diffY // 2),
                        (diffX // 2, diffX - diffX // 2), (0, 0)))
    x = jnp.concatenate([x2, x1u], axis=-1)
    h1 = _ref_conv_bn_relu(x, p["w1"], p["b1"], p["g1"], p["be1"], p["m1"], p["v1"])
    h2 = _ref_conv_bn_relu(h1, p["w2"], p["b2"], p["g2"], p["be2"], p["m2"], p["v2"])
    return jnp.transpose(h2, (0, 3, 1, 2))


if __name__ == "__main__":
    key = jax.random.PRNGKey(0)
    k_param, k_x1, k_x2 = jax.random.split(key, 3)

    in_channels, out_channels = 8, 4
    N, H1, W1 = 8, 8, 8            # x1: deep (low-res) feature map, NCHW
    H2, W2 = 2 * H1, 2 * W1        # x2: skip connection, NCHW
    B_TILE = 4                     # images folded per grid step -> grid=(2,), both v7x TCs busy

    x1 = jax.random.normal(k_x1, (N, in_channels, H1, W1), jnp.float32)
    x2 = jax.random.normal(k_x2, (N, in_channels // 2, H2, W2), jnp.float32)

    params = init_up_params(k_param, in_channels, out_channels)
    kparams = prepare_kernel_params(params, H1, W1, H2, W2, B_TILE)

    out = jax.block_until_ready(jax.jit(up_forward)(x1, x2, kparams))
    ref = jax.block_until_ready(up_forward_ref(x1, x2, params))

    assert out.shape == (N, out_channels, H2, W2), out.shape
    np.testing.assert_allclose(np.asarray(out), np.asarray(ref), rtol=5e-4, atol=5e-4)
    print("KERNEL_OK")
</pallas_src>

<mosaic_0001>
module attributes {stable_mosaic.version = 11 : i64} {
  func.func @_up_fused_kernel(%arg0: i32, %arg1: memref<32x64xf32, #tpu.memory_space<vmem>>, %arg2: memref<64x64xf32, #tpu.memory_space<vmem>>, %arg3: memref<2x72x32xf32, #tpu.memory_space<vmem>>, %arg4: memref<2x64x128xf32, #tpu.memory_space<vmem>>, %arg5: memref<64x128xf32, #tpu.memory_space<vmem>>, %arg6: memref<72x64xf32, #tpu.memory_space<vmem>>, %arg7: memref<72x128xf32, #tpu.memory_space<vmem>>, %arg8: memref<3x128x64xf32, #tpu.memory_space<vmem>>, %arg9: memref<3x64x64xf32, #tpu.memory_space<vmem>>, %arg10: memref<2x64xf32, #tpu.memory_space<vmem>>, %arg11: memref<2x64xf32, #tpu.memory_space<vmem>>, %arg12: memref<70x1xf32, #tpu.memory_space<vmem>>, %arg13: memref<72x64xf32, #tpu.memory_space<vmem>>, %arg14: memref<72x128xf32, #tpu.memory_space<vmem>>, %arg15: memref<72x64xf32, #tpu.memory_space<vmem>>) attributes {dimension_semantics = [#tpu.dimension_semantics<parallel>], iteration_bounds = array<i64: 2>, scalar_prefetch = 0 : i64, scratch_operands = 2 : i64, tpu.core_type = #tpu.core_type<tc>, window_params = [{transform_indices = @transform_0, window_bounds = array<i64: 32, 64>}, {transform_indices = @transform_1, window_bounds = array<i64: 64, 64>}, {pipeline_mode = #tpu.pipeline_mode<synchronous>, transform_indices = @transform_2, window_bounds = array<i64: 2, 72, 32>}, {pipeline_mode = #tpu.pipeline_mode<synchronous>, transform_indices = @transform_3, window_bounds = array<i64: 2, 64, 128>}, {pipeline_mode = #tpu.pipeline_mode<synchronous>, transform_indices = @transform_4, window_bounds = array<i64: 64, 128>}, {pipeline_mode = #tpu.pipeline_mode<synchronous>, transform_indices = @transform_5, window_bounds = array<i64: 72, 64>}, {pipeline_mode = #tpu.pipeline_mode<synchronous>, transform_indices = @transform_6, window_bounds = array<i64: 72, 128>}, {pipeline_mode = #tpu.pipeline_mode<synchronous>, transform_indices = @transform_7, window_bounds = array<i64: 3, 128, 64>}, {pipeline_mode = #tpu.pipeline_mode<synchronous>, transform_indices = @transform_8, window_bounds = array<i64: 3, 64, 64>}, {pipeline_mode = #tpu.pipeline_mode<synchronous>, transform_indices = @transform_9, window_bounds = array<i64: 2, 64>}, {pipeline_mode = #tpu.pipeline_mode<synchronous>, transform_indices = @transform_10, window_bounds = array<i64: 2, 64>}, {pipeline_mode = #tpu.pipeline_mode<synchronous>, transform_indices = @transform_11, window_bounds = array<i64: 70, 1>}, {transform_indices = @transform_12, window_bounds = array<i64: 72, 64>}]} {
    %c0 = arith.constant 0 : index
    %c0_0 = arith.constant 0 : index
    %0 = vector.load %arg1[%c0, %c0_0] : memref<32x64xf32, #tpu.memory_space<vmem>>, vector<32x64xf32>
    %c0_1 = arith.constant 0 : index
    %c0_2 = arith.constant 0 : index
    %1 = vector.load %arg2[%c0_1, %c0_2] : memref<64x64xf32, #tpu.memory_space<vmem>>, vector<64x64xf32>
    %c0_3 = arith.constant 0 : index
    %c0_4 = arith.constant 0 : index
    %c0_5 = arith.constant 0 : index
    %2 = vector.load %arg4[%c0_3, %c0_4, %c0_5] : memref<2x64x128xf32, #tpu.memory_space<vmem>>, vector<1x64x128xf32>
    %3 = vector.shape_cast %2 : vector<1x64x128xf32> to vector<64x128xf32>
    %cst = arith.constant dense<0.000000e+00> : vector<32x128xf32>
    %4 = tpu.matmul %0, %3, %cst {dimension_numbers = #tpu.dot_dimension_numbers<[1], [0], [0], [1], [0, 0, 1, 1], [], []>} : vector<32x64xf32>, vector<64x128xf32>, vector<32x128xf32> -> vector<32x128xf32>
    %c1 = arith.constant 1 : index
    %c0_6 = arith.constant 0 : index
    %c0_7 = arith.constant 0 : index
    %5 = vector.load %arg4[%c1, %c0_6, %c0_7] : memref<2x64x128xf32, #tpu.memory_space<vmem>>, vector<1x64x128xf32>
    %6 = vector.shape_cast %5 : vector<1x64x128xf32> to vector<64x128xf32>
    %cst_8 = arith.constant dense<0.000000e+00> : vector<32x128xf32>
    %7 = tpu.matmul %0, %6, %cst_8 {dimension_numbers = #tpu.dot_dimension_numbers<[1], [0], [0], [1], [0, 0, 1, 1], [], []>} : vector<32x64xf32>, vector<64x128xf32>, vector<32x128xf32> -> vector<32x128xf32>
    %c0_9 = arith.constant 0 : index
    %c0_10 = arith.constant 0 : index
    %8 = vector.load %arg5[%c0_9, %c0_10] : memref<64x128xf32, #tpu.memory_space<vmem>>, vector<64x128xf32>
    %cst_11 = arith.constant dense<0.000000e+00> : vector<64x128xf32>
    %9 = tpu.matmul %1, %8, %cst_11 {dimension_numbers = #tpu.dot_dimension_numbers<[1], [0], [0], [1], [0, 0, 1, 1], [], []>} : vector<64x64xf32>, vector<64x128xf32>, vector<64x128xf32> -> vector<64x128xf32>
    %c0_12 = arith.constant 0 : index
    %c0_13 = arith.constant 0 : index
    %10 = vector.load %arg6[%c0_12, %c0_13] : memref<72x64xf32, #tpu.memory_space<vmem>>, vector<72x64xf32>
    %cst_14 = arith.constant dense<0.000000e+00> : vector<72x128xf32>
    %11 = tpu.matmul %10, %9, %cst_14 {dimension_numbers = #tpu.dot_dimension_numbers<[1], [0], [0], [1], [0, 0, 1, 1], [], []>} : vector<72x64xf32>, vector<64x128xf32>, vector<72x128xf32> -> vector<72x128xf32>
    %c0_15 = arith.constant 0 : index
    %c0_16 = arith.constant 0 : index
    %c0_17 = arith.constant 0 : index
    %12 = vector.load %arg3[%c0_15, %c0_16, %c0_17] : memref<2x72x32xf32, #tpu.memory_space<vmem>>, vector<1x72x32xf32>
    %13 = vector.shape_cast %12 : vector<1x72x32xf32> to vector<72x32xf32>
    %cst_18 = arith.constant dense<0.000000e+00> : vector<72x128xf32>
    %14 = tpu.matmul %13, %4, %cst_18 {dimension_numbers = #tpu.dot_dimension_numbers<[1], [0], [0], [1], [0, 0, 1, 1], [], []>} : vector<72x32xf32>, vector<32x128xf32>, vector<72x128xf32> -> vector<72x128xf32>
    %15 = arith.addf %11, %14 : vector<72x128xf32>
    %c1_19 = arith.constant 1 : index
    %c0_20 = arith.constant 0 : index
    %c0_21 = arith.constant 0 : index
    %16 = vector.load %arg3[%c1_19, %c0_20, %c0_21] : memref<2x72x32xf32, #tpu.memory_space<vmem>>, vector<1x72x32xf32>
    %17 = vector.shape_cast %16 : vector<1x72x32xf32> to vector<72x32xf32>
    %cst_22 = arith.constant dense<0.000000e+00> : vector<72x128xf32>
    %18 = tpu.matmul %17, %7, %cst_22 {dimension_numbers = #tpu.dot_dimension_numbers<[1], [0], [0], [1], [0, 0, 1, 1], [], []>} : vector<72x32xf32>, vector<32x128xf32>, vector<72x128xf32> -> vector<72x128xf32>
    %19 = arith.addf %15, %18 : vector<72x128xf32>
    %c0_23 = arith.constant 0 : index
    %c0_24 = arith.constant 0 : index
    %20 = vector.load %arg7[%c0_23, %c0_24] : memref<72x128xf32, #tpu.memory_space<vmem>>, vector<72x128xf32>
    %21 = arith.addf %19, %20 : vector<72x128xf32>
    %c0_25 = arith.constant 0 : index
    %c0_26 = arith.constant 0 : index
    %22 = vector.load %arg14[%c0_25, %c0_26] : memref<72x128xf32, #tpu.memory_space<vmem>>, vector<72x128xf32>
    tpu.vector_store %arg14[%c0_25, %c0_26], %21 {strides = array<i32>} : memref<72x128xf32, #tpu.memory_space<vmem>>, vector<72x128xf32>,
    %c0_27 = arith.constant 0 : index
    %c0_28 = arith.constant 0 : index
    %23 = vector.load %arg14[%c0_27, %c0_28] : memref<72x128xf32, #tpu.memory_space<vmem>>, vector<70x128xf32>
    %c0_29 = arith.constant 0 : index
    %c0_30 = arith.constant 0 : index
    %c0_31 = arith.constant 0 : index
    %24 = vector.load %arg8[%c0_29, %c0_30, %c0_31] : memref<3x128x64xf32, #tpu.memory_space<vmem>>, vector<1x128x64xf32>
    %25 = vector.shape_cast %24 : vector<1x128x64xf32> to vector<128x64xf32>
    %cst_32 = arith.constant dense<0.000000e+00> : vector<70x64xf32>
    %26 = tpu.matmul %23, %25, %cst_32 {dimension_numbers = #tpu.dot_dimension_numbers<[1], [0], [0], [1], [0, 0, 1, 1], [], []>} : vector<70x128xf32>, vector<128x64xf32>, vector<70x64xf32> -> vector<70x64xf32>
    %c1_33 = arith.constant 1 : index
    %c0_34 = arith.constant 0 : index
    %27 = vector.load %arg14[%c1_33, %c0_34] : memref<72x128xf32, #tpu.memory_space<vmem>>, vector<70x128xf32>
    %c1_35 = arith.constant 1 : index
    %c0_36 = arith.constant 0 : index
    %c0_37 = arith.constant 0 : index
    %28 = vector.load %arg8[%c1_35, %c0_36, %c0_37] : memref<3x128x64xf32, #tpu.memory_space<vmem>>, vector<1x128x64xf32>
    %29 = vector.shape_cast %28 : vector<1x128x64xf32> to vector<128x64xf32>
    %cst_38 = arith.constant dense<0.000000e+00> : vector<70x64xf32>
    %30 = tpu.matmul %27, %29, %cst_38 {dimension_numbers = #tpu.dot_dimension_numbers<[1], [0], [0], [1], [0, 0, 1, 1], [], []>} : vector<70x128xf32>, vector<128x64xf32>, vector<70x64xf32> -> vector<70x64xf32>
    %31 = arith.addf %26, %30 : vector<70x64xf32>
    %c2 = arith.constant 2 : index
    %c0_39 = arith.constant 0 : index
    %32 = vector.load %arg14[%c2, %c0_39] : memref<72x128xf32, #tpu.memory_space<vmem>>, vector<70x128xf32>
    %c2_40 = arith.constant 2 : index
    %c0_41 = arith.constant 0 : index
    %c0_42 = arith.constant 0 : index
    %33 = vector.load %arg8[%c2_40, %c0_41, %c0_42] : memref<3x128x64xf32, #tpu.memory_space<vmem>>, vector<1x128x64xf32>
    %34 = vector.shape_cast %33 : vector<1x128x64xf32> to vector<128x64xf32>
    %cst_43 = arith.constant dense<0.000000e+00> : vector<70x64xf32>
    %35 = tpu.matmul %32, %34, %cst_43 {dimension_numbers = #tpu.dot_dimension_numbers<[1], [0], [0], [1], [0, 0, 1, 1], [], []>} : vector<70x128xf32>, vector<128x64xf32>, vector<70x64xf32> -> vector<70x64xf32>
    %36 = arith.addf %31, %35 : vector<70x64xf32>
    %c0_44 = arith.constant 0 : index
    %c0_45 = arith.constant 0 : index
    %37 = vector.load %arg10[%c0_44, %c0_45] : memref<2x64xf32, #tpu.memory_space<vmem>>, vector<1x64xf32>
    %38 = vector.broadcast %37 : vector<1x64xf32> to vector<70x64xf32>
    %39 = arith.mulf %36, %38 : vector<70x64xf32>
    %c1_46 = arith.constant 1 : index
    %c0_47 = arith.constant 0 : index
    %40 = vector.load %arg10[%c1_46, %c0_47] : memref<2x64xf32, #tpu.memory_space<vmem>>, vector<1x64xf32>
    %41 = vector.broadcast %40 : vector<1x64xf32> to vector<70x64xf32>
    %42 = arith.addf %39, %41 : vector<70x64xf32>
    %cst_48 = arith.constant 0.000000e+00 : f32
    %43 = vector.broadcast %cst_48 : f32 to vector<70x64xf32>
    %44 = arith.maximumf %42, %43 : vector<70x64xf32>
    %c0_49 = arith.constant 0 : index
    %c0_50 = arith.constant 0 : index
    %45 = vector.load %arg12[%c0_49, %c0_50] : memref<70x1xf32, #tpu.memory_space<vmem>>, vector<70x1xf32>
    %46 = vector.broadcast %45 : vector<70x1xf32> to vector<70x64xf32>
    %47 = arith.mulf %44, %46 : vector<70x64xf32>
    %cst_51 = arith.constant 0.000000e+00 : f32
    %48 = vector.broadcast %cst_51 : f32 to vector<1x64xf32>
    %c0_52 = arith.constant 0 : index
    %c0_53 = arith.constant 0 : index
    %49 = vector.load %arg15[%c0_52, %c0_53] : memref<72x64xf32, #tpu.memory_space<vmem>>, vector<1x64xf32>
    tpu.vector_store %arg15[%c0_52, %c0_53], %48 {strides = array<i32>} : memref<72x64xf32, #tpu.memory_space<vmem>>, vector<1x64xf32>,
    %cst_54 = arith.constant 0.000000e+00 : f32
    %50 = vector.broadcast %cst_54 : f32 to vector<1x64xf32>
    %c71 = arith.constant 71 : index
    %c0_55 = arith.constant 0 : index
    %51 = vector.load %arg15[%c71, %c0_55] : memref<72x64xf32, #tpu.memory_space<vmem>>, vector<1x64xf32>
    tpu.vector_store %arg15[%c71, %c0_55], %50 {strides = array<i32>} : memref<72x64xf32, #tpu.memory_space<vmem>>, vector<1x64xf32>,
    %c1_56 = arith.constant 1 : index
    %c0_57 = arith.constant 0 : index
    %52 = vector.load %arg15[%c1_56, %c0_57] : memref<72x64xf32, #tpu.memory_space<vmem>>, vector<70x64xf32>
    tpu.vector_store %arg15[%c1_56, %c0_57], %47 {strides = array<i32>} : memref<72x64xf32, #tpu.memory_space<vmem>>, vector<70x64xf32>,
    %c0_58 = arith.constant 0 : index
    %c0_59 = arith.constant 0 : index
    %53 = vector.load %arg15[%c0_58, %c0_59] : memref<72x64xf32, #tpu.memory_space<vmem>>, vector<70x64xf32>
    %c0_60 = arith.constant 0 : index
    %c0_61 = arith.constant 0 : index
    %c0_62 = arith.constant 0 : index
    %54 = vector.load %arg9[%c0_60, %c0_61, %c0_62] : memref<3x64x64xf32, #tpu.memory_space<vmem>>, vector<1x64x64xf32>
    %55 = vector.shape_cast %54 : vector<1x64x64xf32> to vector<64x64xf32>
    %cst_63 = arith.constant dense<0.000000e+00> : vector<70x64xf32>
    %56 = tpu.matmul %53, %55, %cst_63 {dimension_numbers = #tpu.dot_dimension_numbers<[1], [0], [0], [1], [0, 0, 1, 1], [], []>} : vector<70x64xf32>, vector<64x64xf32>, vector<70x64xf32> -> vector<70x64xf32>
    %c1_64 = arith.constant 1 : index
    %c0_65 = arith.constant 0 : index
    %57 = vector.load %arg15[%c1_64, %c0_65] : memref<72x64xf32, #tpu.memory_space<vmem>>, vector<70x64xf32>
    %c1_66 = arith.constant 1 : index
    %c0_67 = arith.constant 0 : index
    %c0_68 = arith.constant 0 : index
    %58 = vector.load %arg9[%c1_66, %c0_67, %c0_68] : memref<3x64x64xf32, #tpu.memory_space<vmem>>, vector<1x64x64xf32>
    %59 = vector.shape_cast %58 : vector<1x64x64xf32> to vector<64x64xf32>
    %cst_69 = arith.constant dense<0.000000e+00> : vector<70x64xf32>
    %60 = tpu.matmul %57, %59, %cst_69 {dimension_numbers = #tpu.dot_dimension_numbers<[1], [0], [0], [1], [0, 0, 1, 1], [], []>} : vector<70x64xf32>, vector<64x64xf32>, vector<70x64xf32> -> vector<70x64xf32>
    %61 = arith.addf %56, %60 : vector<70x64xf32>
    %c2_70 = arith.constant 2 : index
    %c0_71 = arith.constant 0 : index
    %62 = vector.load %arg15[%c2_70, %c0_71] : memref<72x64xf32, #tpu.memory_space<vmem>>, vector<70x64xf32>
    %c2_72 = arith.constant 2 : index
    %c0_73 = arith.constant 0 : index
    %c0_74 = arith.constant 0 : index
    %63 = vector.load %arg9[%c2_72, %c0_73, %c0_74] : memref<3x64x64xf32, #tpu.memory_space<vmem>>, vector<1x64x64xf32>
    %64 = vector.shape_cast %63 : vector<1x64x64xf32> to vector<64x64xf32>
    %cst_75 = arith.constant dense<0.000000e+00> : vector<70x64xf32>
    %65 = tpu.matmul %62, %64, %cst_75 {dimension_numbers = #tpu.dot_dimension_numbers<[1], [0], [0], [1], [0, 0, 1, 1], [], []>} : vector<70x64xf32>, vector<64x64xf32>, vector<70x64xf32> -> vector<70x64xf32>
    %66 = arith.addf %61, %65 : vector<70x64xf32>
    %c0_76 = arith.constant 0 : index
    %c0_77 = arith.constant 0 : index
    %67 = vector.load %arg11[%c0_76, %c0_77] : memref<2x64xf32, #tpu.memory_space<vmem>>, vector<1x64xf32>
    %68 = vector.broadcast %67 : vector<1x64xf32> to vector<70x64xf32>
    %69 = arith.mulf %66, %68 : vector<70x64xf32>
    %c1_78 = arith.constant 1 : index
    %c0_79 = arith.constant 0 : index
    %70 = vector.load %arg11[%c1_78, %c0_79] : memref<2x64xf32, #tpu.memory_space<vmem>>, vector<1x64xf32>
    %71 = vector.broadcast %70 : vector<1x64xf32> to vector<70x64xf32>
    %72 = arith.addf %69, %71 : vector<70x64xf32>
    %cst_80 = arith.constant 0.000000e+00 : f32
    %73 = vector.broadcast %cst_80 : f32 to vector<70x64xf32>
    %74 = arith.maximumf %72, %73 : vector<70x64xf32>
    %c0_81 = arith.constant 0 : index
    %c0_82 = arith.constant 0 : index
    %75 = vector.load %arg13[%c0_81, %c0_82] : memref<72x64xf32, #tpu.memory_space<vmem>>, vector<70x64xf32>
    tpu.vector_store %arg13[%c0_81, %c0_82], %74 {strides = array<i32>} : memref<72x64xf32, #tpu.memory_space<vmem>>, vector<70x64xf32>,
    %cst_83 = arith.constant 0.000000e+00 : f32
    %76 = vector.broadcast %cst_83 : f32 to vector<2x64xf32>
    %c70 = arith.constant 70 : index
    %c0_84 = arith.constant 0 : index
    %77 = vector.load %arg13[%c70, %c0_84] : memref<72x64xf32, #tpu.memory_space<vmem>>, vector<2x64xf32>
    tpu.vector_store %arg13[%c70, %c0_84], %76 {strides = array<i32>} : memref<72x64xf32, #tpu.memory_space<vmem>>, vector<2x64xf32>,
    return
  }
  func.func @transform_0(%arg0: i32) -> (i32, i32) {
    %c0_i32 = arith.constant 0 : i32
    %c0_i32_0 = arith.constant 0 : i32
    return %arg0, %c0_i32 : i32, i32
  }
  func.func @transform_1(%arg0: i32) -> (i32, i32) {
    %c0_i32 = arith.constant 0 : i32
    %c0_i32_0 = arith.constant 0 : i32
    return %arg0, %c0_i32 : i32, i32
  }
  func.func @transform_2(%arg0: i32) -> (i32, i32, i32) {
    %c0_i32 = arith.constant 0 : i32
    %c0_i32_0 = arith.constant 0 : i32
    %c0_i32_1 = arith.constant 0 : i32
    %c0_i32_2 = arith.constant 0 : i32
    return %c0_i32, %c0_i32_0, %c0_i32_1 : i32, i32, i32
  }
  func.func @transform_3(%arg0: i32) -> (i32, i32, i32) {
    %c0_i32 = arith.constant 0 : i32
    %c0_i32_0 = arith.constant 0 : i32
    %c0_i32_1 = arith.constant 0 : i32
    %c0_i32_2 = arith.constant 0 : i32
    return %c0_i32, %c0_i32_0, %c0_i32_1 : i32, i32, i32
  }
  func.func @transform_4(%arg0: i32) -> (i32, i32) {
    %c0_i32 = arith.constant 0 : i32
    %c0_i32_0 = arith.constant 0 : i32
    %c0_i32_1 = arith.constant 0 : i32
    return %c0_i32, %c0_i32_0 : i32, i32
  }
  func.func @transform_5(%arg0: i32) -> (i32, i32) {
    %c0_i32 = arith.constant 0 : i32
    %c0_i32_0 = arith.constant 0 : i32
    %c0_i32_1 = arith.constant 0 : i32
    return %c0_i32, %c0_i32_0 : i32, i32
  }
  func.func @transform_6(%arg0: i32) -> (i32, i32) {
    %c0_i32 = arith.constant 0 : i32
    %c0_i32_0 = arith.constant 0 : i32
    %c0_i32_1 = arith.constant 0 : i32
    return %c0_i32, %c0_i32_0 : i32, i32
  }
  func.func @transform_7(%arg0: i32) -> (i32, i32, i32) {
    %c0_i32 = arith.constant 0 : i32
    %c0_i32_0 = arith.constant 0 : i32
    %c0_i32_1 = arith.constant 0 : i32
    %c0_i32_2 = arith.constant 0 : i32
    return %c0_i32, %c0_i32_0, %c0_i32_1 : i32, i32, i32
  }
  func.func @transform_8(%arg0: i32) -> (i32, i32, i32) {
    %c0_i32 = arith.constant 0 : i32
    %c0_i32_0 = arith.constant 0 : i32
    %c0_i32_1 = arith.constant 0 : i32
    %c0_i32_2 = arith.constant 0 : i32
    return %c0_i32, %c0_i32_0, %c0_i32_1 : i32, i32, i32
  }
  func.func @transform_9(%arg0: i32) -> (i32, i32) {
    %c0_i32 = arith.constant 0 : i32
    %c0_i32_0 = arith.constant 0 : i32
    %c0_i32_1 = arith.constant 0 : i32
    return %c0_i32, %c0_i32_0 : i32, i32
  }
  func.func @transform_10(%arg0: i32) -> (i32, i32) {
    %c0_i32 = arith.constant 0 : i32
    %c0_i32_0 = arith.constant 0 : i32
    %c0_i32_1 = arith.constant 0 : i32
    return %c0_i32, %c0_i32_0 : i32, i32
  }
  func.func @transform_11(%arg0: i32) -> (i32, i32) {
    %c0_i32 = arith.constant 0 : i32
    %c0_i32_0 = arith.constant 0 : i32
    %c0_i32_1 = arith.constant 0 : i32
    return %c0_i32, %c0_i32_0 : i32, i32
  }
  func.func @transform_12(%arg0: i32) -> (i32, i32) {
    %c0_i32 = arith.constant 0 : i32
    %c0_i32_0 = arith.constant 0 : i32
    return %arg0, %c0_i32 : i32, i32
  }
}

</mosaic_0001>

<llo_original>
// kernel: up_forward.1
$region0: #{up_forward.1}
  #allocation0 [shape = 'u32[]', space=smem, size = 0x4, offset = 0x4, fixed_abs, tag = 'smem constant byte address 0x4 - core index']
  #allocation1 [shape = 'u32[72,128]{1,0:T(1,128)}', space=vmem, size = 0x9000, scoped, tag = 'internal scratch']
  #allocation2 [shape = 'f32[72,128]{1,0:T(8,128)}', space=vmem, size = 0x9000, scoped, tag = 'scratch operand']
  #allocation3 [shape = 'f32[72,64]{1,0:T(8,128)}', space=vmem, size = 0x9000, scoped, tag = 'scratch operand']
  %s0 = inlined_call_operand.vmem [shape: f32[64,64], index: 0, kind: input, shape index: {}]
  %s1 = inlined_call_operand.vmem [shape: f32[128,64], index: 1, kind: input, shape index: {}]
  %s2 = inlined_call_operand.vmem [shape: f32[2,72,32], index: 2, kind: input, shape index: {}]
  %s3 = inlined_call_operand.vmem [shape: f32[2,64,128], index: 3, kind: input, shape index: {}]
  %s4 = inlined_call_operand.vmem [shape: f32[64,128], index: 4, kind: input, shape index: {}]
  %s5 = inlined_call_operand.vmem [shape: f32[72,64], index: 5, kind: input, shape index: {}]
  %s6 = inlined_call_operand.vmem [shape: f32[72,128], index: 6, kind: input, shape index: {}]
  %s7 = inlined_call_operand.vmem [shape: f32[3,128,64], index: 7, kind: input, shape index: {}]
  %s8 = inlined_call_operand.vmem [shape: f32[3,64,64], index: 8, kind: input, shape index: {}]
  %s9 = inlined_call_operand.vmem [shape: f32[2,64], index: 9, kind: input, shape index: {}]
  %s10 = inlined_call_operand.vmem [shape: f32[2,64], index: 10, kind: input, shape index: {}]
  %s11 = inlined_call_operand.vmem [shape: f32[70,1], index: 11, kind: input, shape index: {}]
  %s12 = inlined_call_operand.vmem [shape: f32[144,64], index: 12, kind: output, shape index: {}]
  %s13 = sld [smem:[#allocation0]]
  $region81: #{up_forward.1} parent=0
    _
  %s15 = ssub.s32 1, %s13
  %s16 = scalar_select 0, %s15, %s13
  loop: start=0, step=1, limit=4
  $region2: #{up_forward.1} parent=0 // loop_pre_header
    _
  $region3: #{up_forward.1} parent=0 // loop_header
    %s18 = sphi 0, %s22
    %p19 = scmp.ge.s32.totalorder %s18, 4
    %s28 = sphi 0, %s30
    %s31 = sphi 0, %s28
    %s32 = sphi 0, %s31
    %s48 = sphi 0, %s32
    %s54 = sphi 0, %s56
    %s57 = sphi 0, %s54
    %s58 = sphi 0, %s57
    %s74 = sphi 0, %s58
    %s78 = sphi 0, %s78
    %s80 = sphi 0, %s78
    %s81 = sphi 0, %s80
    %s95 = sphi 0, %s81
    %s99 = sphi 0, %s99
    %s101 = sphi 0, %s99
    %s102 = sphi 0, %s101
    %s116 = sphi 0, %s102
    %s120 = sphi 0, %s120
    %s122 = sphi 0, %s120
    %s123 = sphi 0, %s122
    %s137 = sphi 0, %s123
    %s141 = sphi 0, %s141
    %s143 = sphi 0, %s141
    %s144 = sphi 0, %s143
    %s158 = sphi 0, %s144
    %s162 = sphi 0, %s162
    %s164 = sphi 0, %s162
    %s165 = sphi 0, %s164
    %s179 = sphi 0, %s165
    %s183 = sphi 0, %s183
    %s185 = sphi 0, %s183
    %s186 = sphi 0, %s185
    %s200 = sphi 0, %s186
    %s204 = sphi 0, %s204
    %s206 = sphi 0, %s204
    %s207 = sphi 0, %s206
    %s221 = sphi 0, %s207
    %s225 = sphi 0, %s225
    %s227 = sphi 0, %s225
    %s228 = sphi 0, %s227
    %s242 = sphi 0, %s228
    %s246 = sphi 0, %s246
    %s248 = sphi 0, %s246
    %s249 = sphi 0, %s248
    %s263 = sphi 0, %s249
    %s267 = sphi 0, %s267
    %s269 = sphi 0, %s267
    %s270 = sphi 0, %s269
    %s284 = sphi 0, %s270
    %s290 = sphi 0, %s292
    %s293 = sphi 0, %s290
    %s294 = sphi 0, %s293
    %s310 = sphi 0, %s294
  $region4: #{up_forward.1} parent=0 // loop_header_branch
    %21 = sbr.rel (%p19) target = $region8
  $region5: #{up_forward.1} parent=0 // loop_body
    %s23 = ssub.s32 %s18, 1
    %s24 = ssub.s32 %s18, 2
    %s25 = sadd.s32 %s18, 1
    %s26 = ssub.s32 %s18, %s25
    %p27 = scmp.eq.s32.totalorder %s26, 0
    %s29 = sadd.s32 %s28, 1
    %s30 = scalar_select %p27, %s28, %s29
    %p33 = pneg %p27
    %p34 = scmp.eq.s32.totalorder %s18, 1
    %p35 = por %p33, %p34
    %p36 = scmp.ne.s32.totalorder %s28, %s31
    %p37 = scmp.eq.s32.totalorder %s18, 0
    %p38 = por %p36, %p37
    %p39 = scmp.ne.s32.totalorder %s28, %s31
    %p40 = scmp.eq.s32.totalorder %s23, 1
    %p41 = por %p39, %p40
    %p42 = scmp.ne.s32.totalorder %s31, %s32
    %p43 = scmp.eq.s32.totalorder %s23, 0
    %p44 = por %p42, %p43
    %p45 = scmp.ne.s32.totalorder %s31, %s32
    %p46 = scmp.eq.s32.totalorder %s24, 1
    %p47 = por %p45, %p46
    %p49 = scmp.ne.s32.totalorder %s32, %s48
    %p50 = scmp.eq.s32.totalorder %s24, 0
    %p51 = por %p49, %p50
    %s52 = ssub.s32 %s18, %s25
    %p53 = scmp.eq.s32.totalorder %s52, 0
    %s55 = sadd.s32 %s54, 1
    %s56 = scalar_select %p53, %s54, %s55
    %p59 = pneg %p53
    %p60 = scmp.eq.s32.totalorder %s18, 1
    %p61 = por %p59, %p60
    %p62 = scmp.ne.s32.totalorder %s54, %s57
    %p63 = scmp.eq.s32.totalorder %s18, 0
    %p64 = por %p62, %p63
    %p65 = scmp.ne.s32.totalorder %s54, %s57
    %p66 = scmp.eq.s32.totalorder %s23, 1
    %p67 = por %p65, %p66
    %p68 = scmp.ne.s32.totalorder %s57, %s58
    %p69 = scmp.eq.s32.totalorder %s23, 0
    %p70 = por %p68, %p69
    %p71 = scmp.ne.s32.totalorder %s57, %s58
    %p72 = scmp.eq.s32.totalorder %s24, 1
    %p73 = por %p71, %p72
    %p75 = scmp.ne.s32.totalorder %s58, %s74
    %p76 = scmp.eq.s32.totalorder %s24, 0
    %p77 = por %p75, %p76
    %s79 = sadd.s32 %s78, 1
    %p82 = scmp.eq.s32.totalorder %s18, 1
    %p83 = scmp.ne.s32.totalorder %s78, %s80
    %p84 = scmp.eq.s32.totalorder %s18, 0
    %p85 = por %p83, %p84
    %p86 = scmp.ne.s32.totalorder %s78, %s80
    %p87 = scmp.eq.s32.totalorder %s23, 1
    %p88 = por %p86, %p87
    %p89 = scmp.ne.s32.totalorder %s80, %s81
    %p90 = scmp.eq.s32.totalorder %s23, 0
    %p91 = por %p89, %p90
    %p92 = scmp.ne.s32.totalorder %s80, %s81
    %p93 = scmp.eq.s32.totalorder %s24, 1
    %p94 = por %p92, %p93
    %p96 = scmp.ne.s32.totalorder %s81, %s95
    %p97 = scmp.eq.s32.totalorder %s24, 0
    %p98 = por %p96, %p97
    %s100 = sadd.s32 %s99, 1
    %p103 = scmp.eq.s32.totalorder %s18, 1
    %p104 = scmp.ne.s32.totalorder %s99, %s101
    %p105 = scmp.eq.s32.totalorder %s18, 0
    %p106 = por %p104, %p105
    %p107 = scmp.ne.s32.totalorder %s99, %s101
    %p108 = scmp.eq.s32.totalorder %s23, 1
    %p109 = por %p107, %p108
    %p110 = scmp.ne.s32.totalorder %s101, %s102
    %p111 = scmp.eq.s32.totalorder %s23, 0
    %p112 = por %p110, %p111
    %p113 = scmp.ne.s32.totalorder %s101, %s102
    %p114 = scmp.eq.s32.totalorder %s24, 1
    %p115 = por %p113, %p114
    %p117 = scmp.ne.s32.totalorder %s102, %s116
    %p118 = scmp.eq.s32.totalorder %s24, 0
    %p119 = por %p117, %p118
    %s121 = sadd.s32 %s120, 1
    %p124 = scmp.eq.s32.totalorder %s18, 1
    %p125 = scmp.ne.s32.totalorder %s120, %s122
    %p126 = scmp.eq.s32.totalorder %s18, 0
    %p127 = por %p125, %p126
    %p128 = scmp.ne.s32.totalorder %s120, %s122
    %p129 = scmp.eq.s32.totalorder %s23, 1
    %p130 = por %p128, %p129
    %p131 = scmp.ne.s32.totalorder %s122, %s123
    %p132 = scmp.eq.s32.totalorder %s23, 0
    %p133 = por %p131, %p132
    %p134 = scmp.ne.s32.totalorder %s122, %s123
    %p135 = scmp.eq.s32.totalorder %s24, 1
    %p136 = por %p134, %p135
    %p138 = scmp.ne.s32.totalorder %s123, %s137
    %p139 = scmp.eq.s32.totalorder %s24, 0
    %p140 = por %p138, %p139
    %s142 = sadd.s32 %s141, 1
    %p145 = scmp.eq.s32.totalorder %s18, 1
    %p146 = scmp.ne.s32.totalorder %s141, %s143
    %p147 = scmp.eq.s32.totalorder %s18, 0
    %p148 = por %p146, %p147
    %p149 = scmp.ne.s32.totalorder %s141, %s143
    %p150 = scmp.eq.s32.totalorder %s23, 1
    %p151 = por %p149, %p150
    %p152 = scmp.ne.s32.totalorder %s143, %s144
    %p153 = scmp.eq.s32.totalorder %s23, 0
    %p154 = por %p152, %p153
    %p155 = scmp.ne.s32.totalorder %s143, %s144
    %p156 = scmp.eq.s32.totalorder %s24, 1
    %p157 = por %p155, %p156
    %p159 = scmp.ne.s32.totalorder %s144, %s158
    %p160 = scmp.eq.s32.totalorder %s24, 0
    %p161 = por %p159, %p160
    %s163 = sadd.s32 %s162, 1
    %p166 = scmp.eq.s32.totalorder %s18, 1
    %p167 = scmp.ne.s32.totalorder %s162, %s164
    %p168 = scmp.eq.s32.totalorder %s18, 0
    %p169 = por %p167, %p168
    %p170 = scmp.ne.s32.totalorder %s162, %s164
    %p171 = scmp.eq.s32.totalorder %s23, 1
    %p172 = por %p170, %p171
    %p173 = scmp.ne.s32.totalorder %s164, %s165
    %p174 = scmp.eq.s32.totalorder %s23, 0
    %p175 = por %p173, %p174
    %p176 = scmp.ne.s32.totalorder %s164, %s165
    %p177 = scmp.eq.s32.totalorder %s24, 1
    %p178 = por %p176, %p177
    %p180 = scmp.ne.s32.totalorder %s165, %s179
    %p181 = scmp.eq.s32.totalorder %s24, 0
    %p182 = por %p180, %p181
    %s184 = sadd.s32 %s183, 1
    %p187 = scmp.eq.s32.totalorder %s18, 1
    %p188 = scmp.ne.s32.totalorder %s183, %s185
    %p189 = scmp.eq.s32.totalorder %s18, 0
    %p190 = por %p188, %p189
    %p191 = scmp.ne.s32.totalorder %s183, %s185
    %p192 = scmp.eq.s32.totalorder %s23, 1
    %p193 = por %p191, %p192
    %p194 = scmp.ne.s32.totalorder %s185, %s186
    %p195 = scmp.eq.s32.totalorder %s23, 0
    %p196 = por %p194, %p195
    %p197 = scmp.ne.s32.totalorder %s185, %s186
    %p198 = scmp.eq.s32.totalorder %s24, 1
    %p199 = por %p197, %p198
    %p201 = scmp.ne.s32.totalorder %s186, %s200
    %p202 = scmp.eq.s32.totalorder %s24, 0
    %p203 = por %p201, %p202
    %s205 = sadd.s32 %s204, 1
    %p208 = scmp.eq.s32.totalorder %s18, 1
    %p209 = scmp.ne.s32.totalorder %s204, %s206
    %p210 = scmp.eq.s32.totalorder %s18, 0
    %p211 = por %p209, %p210
    %p212 = scmp.ne.s32.totalorder %s204, %s206
    %p213 = scmp.eq.s32.totalorder %s23, 1
    %p214 = por %p212, %p213
    %p215 = scmp.ne.s32.totalorder %s206, %s207
    %p216 = scmp.eq.s32.totalorder %s23, 0
    %p217 = por %p215, %p216
    %p218 = scmp.ne.s32.totalorder %s206, %s207
    %p219 = scmp.eq.s32.totalorder %s24, 1
    %p220 = por %p218, %p219
    %p222 = scmp.ne.s32.totalorder %s207, %s221
    %p223 = scmp.eq.s32.totalorder %s24, 0
    %p224 = por %p222, %p223
    %s226 = sadd.s32 %s225, 1
    %p229 = scmp.eq.s32.totalorder %s18, 1
    %p230 = scmp.ne.s32.totalorder %s225, %s227
    %p231 = scmp.eq.s32.totalorder %s18, 0
    %p232 = por %p230, %p231
    %p233 = scmp.ne.s32.totalorder %s225, %s227
    %p234 = scmp.eq.s32.totalorder %s23, 1
    %p235 = por %p233, %p234
    %p236 = scmp.ne.s32.totalorder %s227, %s228
    %p237 = scmp.eq.s32.totalorder %s23, 0
    %p238 = por %p236, %p237
    %p239 = scmp.ne.s32.totalorder %s227, %s228
    %p240 = scmp.eq.s32.totalorder %s24, 1
    %p241 = por %p239, %p240
    %p243 = scmp.ne.s32.totalorder %s228, %s242
    %p244 = scmp.eq.s32.totalorder %s24, 0
    %p245 = por %p243, %p244
    %s247 = sadd.s32 %s246, 1
    %p250 = scmp.eq.s32.totalorder %s18, 1
    %p251 = scmp.ne.s32.totalorder %s246, %s248
    %p252 = scmp.eq.s32.totalorder %s18, 0
    %p253 = por %p251, %p252
    %p254 = scmp.ne.s32.totalorder %s246, %s248
    %p255 = scmp.eq.s32.totalorder %s23, 1
    %p256 = por %p254, %p255
    %p257 = scmp.ne.s32.totalorder %s248, %s249
    %p258 = scmp.eq.s32.totalorder %s23, 0
    %p259 = por %p257, %p258
    %p260 = scmp.ne.s32.totalorder %s248, %s249
    %p261 = scmp.eq.s32.totalorder %s24, 1
    %p262 = por %p260, %p261
    %p264 = scmp.ne.s32.totalorder %s249, %s263
    %p265 = scmp.eq.s32.totalorder %s24, 0
    %p266 = por %p264, %p265
    %s268 = sadd.s32 %s267, 1
    %p271 = scmp.eq.s32.totalorder %s18, 1
    %p272 = scmp.ne.s32.totalorder %s267, %s269
    %p273 = scmp.eq.s32.totalorder %s18, 0
    %p274 = por %p272, %p273
    %p275 = scmp.ne.s32.totalorder %s267, %s269
    %p276 = scmp.eq.s32.totalorder %s23, 1
    %p277 = por %p275, %p276
    %p278 = scmp.ne.s32.totalorder %s269, %s270
    %p279 = scmp.eq.s32.totalorder %s23, 0
    %p280 = por %p278, %p279
    %p281 = scmp.ne.s32.totalorder %s269, %s270
    %p282 = scmp.eq.s32.totalorder %s24, 1
    %p283 = por %p281, %p282
    %p285 = scmp.ne.s32.totalorder %s270, %s284
    %p286 = scmp.eq.s32.totalorder %s24, 0
    %p287 = por %p285, %p286
    %s288 = ssub.s32 %s18, %s25
    %p289 = scmp.eq.s32.totalorder %s288, 0
    %s291 = sadd.s32 %s290, 1
    %s292 = scalar_select %p289, %s290, %s291
    %p295 = pneg %p289
    %p296 = scmp.eq.s32.totalorder %s18, 1
    %p297 = por %p295, %p296
    %p298 = scmp.ne.s32.totalorder %s290, %s293
    %p299 = scmp.eq.s32.totalorder %s18, 0
    %p300 = por %p298, %p299
    %p301 = scmp.ne.s32.totalorder %s290, %s293
    %p302 = scmp.eq.s32.totalorder %s23, 1
    %p303 = por %p301, %p302
    %p304 = scmp.ne.s32.totalorder %s293, %s294
    %p305 = scmp.eq.s32.totalorder %s23, 0
    %p306 = por %p304, %p305
    %p307 = scmp.ne.s32.totalorder %s293, %s294
    %p308 = scmp.eq.s32.totalorder %s24, 1
    %p309 = por %p307, %p308
    %p311 = scmp.ne.s32.totalorder %s294, %s310
    %p312 = scmp.eq.s32.totalorder %s24, 0
    %p313 = por %p311, %p312
    %p314 = scmp.le.s32.totalorder 1, %s18
    %p315 = scmp.lt.s32.totalorder %s18, 3
    %p316 = pnand %p314, %p315
    %p317 = pneg %p316
    // Predicated region
    $region9: #{up_forward.1} parent=5 // pred_check
      _
    $region10: #{up_forward.1} parent=5 // pred_check_branch
      %319 = sbr.rel (%p316) target = $region12
    $region11: #{up_forward.1} parent=5 // pred_region
      %s320 = ssub.s32 %s18, 1
      // Predicated region
      $region13: #{up_forward.1} parent=11 // pred_check
        %p321 = pneg %p91
      $region14: #{up_forward.1} parent=11 // pred_check_branch
        %323 = sbr.rel (%p321) target = $region16
      $region15: #{up_forward.1} parent=11 // pred_region
        _
      $region16: #{up_forward.1} parent=11 // pred_fallthru
        _
      // Predicated region
      $region17: #{up_forward.1} parent=11 // pred_check
        %p324 = pneg %p112
      $region18: #{up_forward.1} parent=11 // pred_check_branch
        %326 = sbr.rel (%p324) target = $region20
      $region19: #{up_forward.1} parent=11 // pred_region
        _
      $region20: #{up_forward.1} parent=11 // pred_fallthru
        _
      // Predicated region
      $region21: #{up_forward.1} parent=11 // pred_check
        %p327 = pneg %p133
      $region22: #{up_forward.1} parent=11 // pred_check_branch
        %329 = sbr.rel (%p327) target = $region24
      $region23: #{up_forward.1} parent=11 // pred_region
        _
      $region24: #{up_forward.1} parent=11 // pred_fallthru
        _
      // Predicated region
      $region25: #{up_forward.1} parent=11 // pred_check
        %p330 = pneg %p154
      $region26: #{up_forward.1} parent=11 // pred_check_branch
        %332 = sbr.rel (%p330) target = $region28
      $region27: #{up_forward.1} parent=11 // pred_region
        _
      $region28: #{up_forward.1} parent=11 // pred_fallthru
        _
      // Predicated region
      $region29: #{up_forward.1} parent=11 // pred_check
        %p333 = pneg %p175
      $region30: #{up_forward.1} parent=11 // pred_check_branch
        %335 = sbr.rel (%p333) target = $region32
      $region31: #{up_forward.1} parent=11 // pred_region
        _
      $region32: #{up_forward.1} parent=11 // pred_fallthru
        _
      // Predicated region
      $region33: #{up_forward.1} parent=11 // pred_check
        %p336 = pneg %p196
      $region34: #{up_forward.1} parent=11 // pred_check_branch
        %338 = sbr.rel (%p336) target = $region36
      $region35: #{up_forward.1} parent=11 // pred_region
        _
      $region36: #{up_forward.1} parent=11 // pred_fallthru
        _
      // Predicated region
      $region37: #{up_forward.1} parent=11 // pred_check
        %p339 = pneg %p217
      $region38: #{up_forward.1} parent=11 // pred_check_branch
        %341 = sbr.rel (%p339) target = $region40
      $region39: #{up_forward.1} parent=11 // pred_region
        _
      $region40: #{up_forward.1} parent=11 // pred_fallthru
        _
      // Predicated region
      $region41: #{up_forward.1} parent=11 // pred_check
        %p342 = pneg %p238
      $region42: #{up_forward.1} parent=11 // pred_check_branch
        %344 = sbr.rel (%p342) target = $region44
      $region43: #{up_forward.1} parent=11 // pred_region
        _
      $region44: #{up_forward.1} parent=11 // pred_fallthru
        _
      // Predicated region
      $region45: #{up_forward.1} parent=11 // pred_check
        %p345 = pneg %p259
      $region46: #{up_forward.1} parent=11 // pred_check_branch
        %347 = sbr.rel (%p345) target = $region48
      $region47: #{up_forward.1} parent=11 // pred_region
        _
      $region48: #{up_forward.1} parent=11 // pred_fallthru
        _
      // Predicated region
      $region49: #{up_forward.1} parent=11 // pred_check
        %p348 = pneg %p280
      $region50: #{up_forward.1} parent=11 // pred_check_branch
        %350 = sbr.rel (%p348) target = $region52
      $region51: #{up_forward.1} parent=11 // pred_region
        _
      $region52: #{up_forward.1} parent=11 // pred_fallthru
        _
    $region12: #{up_forward.1} parent=5 // pred_fallthru
      _
    %p351 = scmp.lt.s32.totalorder %s18, 2
    // Predicated region
    $region53: #{up_forward.1} parent=5 // pred_check
      %p352 = pneg %p351
    $region54: #{up_forward.1} parent=5 // pred_check_branch
      %354 = sbr.rel (%p352) target = $region56
    $region55: #{up_forward.1} parent=5 // pred_region
      // Predicated region
      $region57: #{up_forward.1} parent=55 // pred_check
        %p355 = pneg %p38
      $region58: #{up_forward.1} parent=55 // pred_check_branch
        %357 = sbr.rel (%p355) target = $region60
      $region59: #{up_forward.1} parent=55 // pred_region
        %s358 = smul.u32 4, %s18
        %p359 = scmp.lt.s32.totalorder %s358, 7
        %s360 = scalar_select %p359, %s358, 7
        %s361 = smul.addr %s360, 8
        %s362 = scalar_lea.vmem %s0, %s361
        %s363 = smul.u32 4, %s18
      $region60: #{up_forward.1} parent=55 // pred_fallthru
        _
      // Predicated region
      $region61: #{up_forward.1} parent=55 // pred_check
        %p364 = pneg %p64
      $region62: #{up_forward.1} parent=55 // pred_check_branch
        %366 = sbr.rel (%p364) target = $region64
      $region63: #{up_forward.1} parent=55 // pred_region
        %s367 = smul.u32 8, %s18
        %p368 = scmp.lt.s32.totalorder %s367, 15
        %s369 = scalar_select %p368, %s367, 15
        %s370 = smul.addr %s369, 8
        %s371 = scalar_lea.vmem %s1, %s370
        %s372 = smul.u32 8, %s18
      $region64: #{up_forward.1} parent=55 // pred_fallthru
        _
    $region56: #{up_forward.1} parent=5 // pred_fallthru
      _
    %p373 = scmp.le.s32.totalorder 1, %s18
    %p374 = scmp.lt.s32.totalorder %s18, 3
    %p375 = pnand %p373, %p374
    %p376 = pneg %p375
    // Predicated region
    $region65: #{up_forward.1} parent=5 // pred_check
      _
    $region66: #{up_forward.1} parent=5 // pred_check_branch
      %378 = sbr.rel (%p375) target = $region68
    $region67: #{up_forward.1} parent=5 // pred_region
      %s379 = ssub.s32 %s18, 1
      %s380 = smul.u32 4, %s23
      %p381 = scmp.lt.s32.totalorder %s380, 7
      %s382 = scalar_select %p381, %s380, 7
      %s383 = smul.addr %s382, 8
      %s384 = scalar_lea.vmem %s0, %s383
      %p385 = pneg %p44
      %p386 = pneg %p41
      %s387 = smul.u32 8, %s23
      %p388 = scmp.lt.s32.totalorder %s387, 15
      %s389 = scalar_select %p388, %s387, 15
      %s390 = smul.addr %s389, 8
      %s391 = scalar_lea.vmem %s1, %s390
      %p392 = pneg %p70
      %p393 = pneg %p67
      %p394 = pneg %p91
      %p395 = pneg %p88
      %p396 = pneg %p112
      %p397 = pneg %p109
      %p398 = pneg %p133
      %p399 = pneg %p130
      %p400 = pneg %p154
      %p401 = pneg %p151
      %p402 = pneg %p175
      %p403 = pneg %p172
      %p404 = pneg %p196
      %p405 = pneg %p193
      %p406 = pneg %p217
      %p407 = pneg %p214
      %p408 = pneg %p238
      %p409 = pneg %p235
      %p410 = pneg %p259
      %p411 = pneg %p256
      %p412 = pneg %p280
      %p413 = pneg %p277
      %p414 = pneg %p306
      %p415 = pneg %p303
      %s416 = smul.u32 9, %s23
      %p417 = scmp.lt.s32.totalorder %s416, 17
      %s418 = scalar_select %p417, %s416, 17
      %s419 = smul.addr %s418, 8
      %s420 = scalar_lea.vmem %s12, %s419
      %s421 = smul.u32 4, %s23
      %p422 = scmp.lt.s32.totalorder %s421, 7
      %s423 = scalar_select %p422, %s421, 7
      %s424 = smul.addr %s423, 8
      %s425 = scalar_lea.vmem %s0, %s424
      %s426 = smul.u32 4, %s23
      %s427 = smul.u32 8, %s23
      %p428 = scmp.lt.s32.totalorder %s427, 15
      %s429 = scalar_select %p428, %s427, 15
      %s430 = smul.addr %s429, 8
      %s431 = scalar_lea.vmem %s1, %s430
      %s432 = smul.u32 8, %s23
      %s433 = smul.u32 9, %s23
      %p434 = scmp.lt.s32.totalorder %s433, 17
      %s435 = scalar_select %p434, %s433, 17
      %s436 = smul.addr %s435, 8
      %s437 = scalar_lea.vmem %s12, %s436
      %s438 = smul.u32 9, %s23
      %v439 = vld [vmem:[%s425] sm:$0xff]
      %v440 = vld [vmem:[%s425 + $0x8] sm:$0xff]
      %v441 = vld [vmem:[%s425 + $0x10] sm:$0xff]
      %v442 = vld [vmem:[%s425 + $0x18] sm:$0xff]
      %v443 = vld [vmem:[%s431] sm:$0xff]
      %v444 = vld [vmem:[%s431 + $0x8] sm:$0xff]
      %v445 = vld [vmem:[%s431 + $0x10] sm:$0xff]
      %v446 = vld [vmem:[%s431 + $0x18] sm:$0xff]
      %v447 = vld [vmem:[%s431 + $0x20] sm:$0xff]
      %v448 = vld [vmem:[%s431 + $0x28] sm:$0xff]
      %v449 = vld [vmem:[%s431 + $0x30] sm:$0xff]
      %v450 = vld [vmem:[%s431 + $0x38] sm:$0xff]
      %v451 = vld [vmem:[%s3] sm:$0xff]
      %v452 = vld [vmem:[%s3 + $0x8] sm:$0xff]
      %v453 = vld [vmem:[%s3 + $0x10] sm:$0xff]
      %v454 = vld [vmem:[%s3 + $0x18] sm:$0xff]
      %v455 = vld [vmem:[%s3 + $0x20] sm:$0xff]
      %v456 = vld [vmem:[%s3 + $0x28] sm:$0xff]
      %v457 = vld [vmem:[%s3 + $0x30] sm:$0xff]
      %v458 = vld [vmem:[%s3 + $0x38] sm:$0xff]
      %vm459 = vcmask 523264
      %v461 = vsel %vm459, %v439, 0
      %v464 = vsel %vm459, %v440, 0
      %v467 = vsel %vm459, %v441, 0
      %v470 = vsel %vm459, %v442, 0
      %472 = vmatpush.msra.mxu0 0.0
      %473 = vmatpush.msra.mxu0 0.0
      %474 = vmatpush.msra.mxu0 0.0
      %475 = vmatpush.msra.mxu0 0.0
      %476 = vmatpush.msra.mxu0 0.0
      %477 = vmatpush.msra.mxu0 0.0
      %478 = vmatpush.msra.mxu0 0.0
      %479 = vmatpush.msra.mxu0 0.0
      %480 = vmatpush.msra.mxu0 %v458
      %481 = vmatpush.msra.mxu0 %v457
      %482 = vmatpush.msra.mxu0 %v456
      %483 = vmatpush.msra.mxu0 %v455
      %484 = vmatpush.msra.mxu0 %v454
      %485 = vmatpush.msra.mxu0 %v453
      %486 = vmatpush.msra.mxu0 %v452
      %487 = vmatpush.msra.mxu0 %v451
      %488 = vmatmul.f32.gmra.mxu0 %v461
      %v489 = vpop.f32.mrf.mxu0
      %v490 = vadd.f32 0.0, %v489
      %491 = vmatmul.f32.gmra.mxu0 %v464
      %v492 = vpop.f32.mrf.mxu0
      %v493 = vadd.f32 0.0, %v492
      %494 = vmatmul.f32.gmra.mxu0 %v467
      %v495 = vpop.f32.mrf.mxu0
      %v496 = vadd.f32 0.0, %v495
      %497 = vmatmul.f32.gmra.mxu0 %v470
      %v498 = vpop.f32.mrf.mxu0
      %v499 = vadd.f32 0.0, %v498
      %500 = vdwg.mxu0
      %s501 = scalar_lea.vmem %s3, 64
      %v502 = vld [vmem:[%s501] sm:$0xff]
      %v503 = vld [vmem:[%s501 + $0x8] sm:$0xff]
      %v504 = vld [vmem:[%s501 + $0x10] sm:$0xff]
      %v505 = vld [vmem:[%s501 + $0x18] sm:$0xff]
      %v506 = vld [vmem:[%s501 + $0x20] sm:$0xff]
      %v507 = vld [vmem:[%s501 + $0x28] sm:$0xff]
      %v508 = vld [vmem:[%s501 + $0x30] sm:$0xff]
      %v509 = vld [vmem:[%s501 + $0x38] sm:$0xff]
      %510 = vmatpush.msra.mxu0 0.0
      %511 = vmatpush.msra.mxu0 0.0
      %512 = vmatpush.msra.mxu0 0.0
      %513 = vmatpush.msra.mxu0 0.0
      %514 = vmatpush.msra.mxu0 0.0
      %515 = vmatpush.msra.mxu0 0.0
      %516 = vmatpush.msra.mxu0 0.0
      %517 = vmatpush.msra.mxu0 0.0
      %518 = vmatpush.msra.mxu0 %v509
      %519 = vmatpush.msra.mxu0 %v508
      %520 = vmatpush.msra.mxu0 %v507
      %521 = vmatpush.msra.mxu0 %v506
      %522 = vmatpush.msra.mxu0 %v505
      %523 = vmatpush.msra.mxu0 %v504
      %524 = vmatpush.msra.mxu0 %v503
      %525 = vmatpush.msra.mxu0 %v502
      %526 = vmatmul.f32.gmra.mxu0 %v461
      %v527 = vpop.f32.mrf.mxu0
      %v528 = vadd.f32 0.0, %v527
      %529 = vmatmul.f32.gmra.mxu0 %v464
      %v530 = vpop.f32.mrf.mxu0
      %v531 = vadd.f32 0.0, %v530
      %532 = vmatmul.f32.gmra.mxu0 %v467
      %v533 = vpop.f32.mrf.mxu0
      %v534 = vadd.f32 0.0, %v533
      %535 = vmatmul.f32.gmra.mxu0 %v470
      %v536 = vpop.f32.mrf.mxu0
      %v537 = vadd.f32 0.0, %v536
      %538 = vdwg.mxu0
      %v539 = vld [vmem:[%s4] sm:$0xff]
      %v540 = vld [vmem:[%s4 + $0x8] sm:$0xff]
      %v541 = vld [vmem:[%s4 + $0x10] sm:$0xff]
      %v542 = vld [vmem:[%s4 + $0x18] sm:$0xff]
      %v543 = vld [vmem:[%s4 + $0x20] sm:$0xff]
      %v544 = vld [vmem:[%s4 + $0x28] sm:$0xff]
      %v545 = vld [vmem:[%s4 + $0x30] sm:$0xff]
      %v546 = vld [vmem:[%s4 + $0x38] sm:$0xff]
      %v548 = vsel %vm459, %v443, 0
      %v551 = vsel %vm459, %v444, 0
      %v554 = vsel %vm459, %v445, 0
      %v557 = vsel %vm459, %v446, 0
      %v560 = vsel %vm459, %v447, 0
      %v563 = vsel %vm459, %v448, 0
      %v566 = vsel %vm459, %v449, 0
      %v569 = vsel %vm459, %v450, 0
      %571 = vmatpush.msra.mxu0 0.0
      %572 = vmatpush.msra.mxu0 0.0
      %573 = vmatpush.msra.mxu0 0.0
      %574 = vmatpush.msra.mxu0 0.0
      %575 = vmatpush.msra.mxu0 0.0
      %576 = vmatpush.msra.mxu0 0.0
      %577 = vmatpush.msra.mxu0 0.0
      %578 = vmatpush.msra.mxu0 0.0
      %579 = vmatpush.msra.mxu0 %v546
      %580 = vmatpush.msra.mxu0 %v545
      %581 = vmatpush.msra.mxu0 %v544
      %582 = vmatpush.msra.mxu0 %v543
      %583 = vmatpush.msra.mxu0 %v542
      %584 = vmatpush.msra.mxu0 %v541
      %585 = vmatpush.msra.mxu0 %v540
      %586 = vmatpush.msra.mxu0 %v539
      %587 = vmatmul.f32.gmra.mxu0 %v548
      %v588 = vpop.f32.mrf.mxu0
      %v589 = vadd.f32 0.0, %v588
      %590 = vmatmul.f32.gmra.mxu0 %v551
      %v591 = vpop.f32.mrf.mxu0
      %v592 = vadd.f32 0.0, %v591
      %593 = vmatmul.f32.gmra.mxu0 %v554
      %v594 = vpop.f32.mrf.mxu0
      %v595 = vadd.f32 0.0, %v594
      %596 = vmatmul.f32.gmra.mxu0 %v557
      %v597 = vpop.f32.mrf.mxu0
      %v598 = vadd.f32 0.0, %v597
      %599 = vmatmul.f32.gmra.mxu0 %v560
      %v600 = vpop.f32.mrf.mxu0
      %v601 = vadd.f32 0.0, %v600
      %602 = vmatmul.f32.gmra.mxu0 %v563
      %v603 = vpop.f32.mrf.mxu0
      %v604 = vadd.f32 0.0, %v603
      %605 = vmatmul.f32.gmra.mxu0 %v566
      %v606 = vpop.f32.mrf.mxu0
      %v607 = vadd.f32 0.0, %v606
      %608 = vmatmul.f32.gmra.mxu0 %v569
      %v609 = vpop.f32.mrf.mxu0
      %v610 = vadd.f32 0.0, %v609
      %611 = vdwg.mxu0
      %v612 = vld [vmem:[%s5] sm:$0xff]
      %v613 = vld [vmem:[%s5 + $0x8] sm:$0xff]
      %v614 = vld [vmem:[%s5 + $0x10] sm:$0xff]
      %v615 = vld [vmem:[%s5 + $0x18] sm:$0xff]
      %v616 = vld [vmem:[%s5 + $0x20] sm:$0xff]
      %v617 = vld [vmem:[%s5 + $0x28] sm:$0xff]
      %v618 = vld [vmem:[%s5 + $0x30] sm:$0xff]
      %v619 = vld [vmem:[%s5 + $0x38] sm:$0xff]
      %v620 = vld [vmem:[%s5 + $0x40] sm:$0xff]
      %v621 = vld [vmem:[%s2] sm:$0xff]
      %v622 = vld [vmem:[%s2 + $0x8] sm:$0xff]
      %v623 = vld [vmem:[%s2 + $0x10] sm:$0xff]
      %v624 = vld [vmem:[%s2 + $0x18] sm:$0xff]
      %v625 = vld [vmem:[%s2 + $0x20] sm:$0xff]
      %v626 = vld [vmem:[%s2 + $0x28] sm:$0xff]
      %v627 = vld [vmem:[%s2 + $0x30] sm:$0xff]
      %v628 = vld [vmem:[%s2 + $0x38] sm:$0xff]
      %v629 = vld [vmem:[%s2 + $0x40] sm:$0xff]
      %vm630 = vcmask 261120
      %v632 = vsel %vm630, %v621, 0
      %v635 = vsel %vm630, %v622, 0
      %v638 = vsel %vm630, %v623, 0
      %v641 = vsel %vm630, %v624, 0
      %v644 = vsel %vm630, %v625, 0
      %v647 = vsel %vm630, %v626, 0
      %v650 = vsel %vm630, %v627, 0
      %v653 = vsel %vm630, %v628, 0
      %v656 = vsel %vm630, %v629, 0
      %658 = vmatpush.msra.mxu0 0.0
      %659 = vmatpush.msra.mxu0 0.0
      %660 = vmatpush.msra.mxu0 0.0
      %661 = vmatpush.msra.mxu0 0.0
      %662 = vmatpush.msra.mxu0 0.0
      %663 = vmatpush.msra.mxu0 0.0
      %664 = vmatpush.msra.mxu0 0.0
      %665 = vmatpush.msra.mxu0 0.0
      %666 = vmatpush.msra.mxu0 0.0
      %667 = vmatpush.msra.mxu0 0.0
      %668 = vmatpush.msra.mxu0 0.0
      %669 = vmatpush.msra.mxu0 0.0
      %670 = vmatpush.msra.mxu0 %v499
      %671 = vmatpush.msra.mxu0 %v496
      %672 = vmatpush.msra.mxu0 %v493
      %673 = vmatpush.msra.mxu0 %v490
      %674 = vmatmul.f32.gmra.mxu0 %v632
      %v675 = vpop.f32.mrf.mxu0
      %v676 = vadd.f32 0.0, %v675
      %677 = vmatmul.f32.gmra.mxu0 %v635
      %v678 = vpop.f32.mrf.mxu0
      %v679 = vadd.f32 0.0, %v678
      %680 = vmatmul.f32.gmra.mxu0 %v638
      %v681 = vpop.f32.mrf.mxu0
      %v682 = vadd.f32 0.0, %v681
      %683 = vmatmul.f32.gmra.mxu0 %v641
      %v684 = vpop.f32.mrf.mxu0
      %v685 = vadd.f32 0.0, %v684
      %686 = vmatmul.f32.gmra.mxu0 %v644
      %v687 = vpop.f32.mrf.mxu0
      %v688 = vadd.f32 0.0, %v687
      %689 = vmatmul.f32.gmra.mxu0 %v647
      %v690 = vpop.f32.mrf.mxu0
      %v691 = vadd.f32 0.0, %v690
      %692 = vmatmul.f32.gmra.mxu0 %v650
      %v693 = vpop.f32.mrf.mxu0
      %v694 = vadd.f32 0.0, %v693
      %695 = vmatmul.f32.gmra.mxu0 %v653
      %v696 = vpop.f32.mrf.mxu0
      %v697 = vadd.f32 0.0, %v696
      %698 = vmatmul.f32.gmra.mxu0 %v656
      %v699 = vpop.f32.mrf.mxu0
      %v700 = vadd.f32 0.0, %v699
      %701 = vdwg.mxu0
      %v703 = vsel %vm459, %v612, 0
      %v706 = vsel %vm459, %v613, 0
      %v709 = vsel %vm459, %v614, 0
      %v712 = vsel %vm459, %v615, 0
      %v715 = vsel %vm459, %v616, 0
      %v718 = vsel %vm459, %v617, 0
      %v721 = vsel %vm459, %v618, 0
      %v724 = vsel %vm459, %v619, 0
      %v727 = vsel %vm459, %v620, 0
      %729 = vmatpush.msra.mxu0 0.0
      %730 = vmatpush.msra.mxu0 0.0
      %731 = vmatpush.msra.mxu0 0.0
      %732 = vmatpush.msra.mxu0 0.0
      %733 = vmatpush.msra.mxu0 0.0
      %734 = vmatpush.msra.mxu0 0.0
      %735 = vmatpush.msra.mxu0 0.0
      %736 = vmatpush.msra.mxu0 0.0
      %737 = vmatpush.msra.mxu0 %v610
      %738 = vmatpush.msra.mxu0 %v607
      %739 = vmatpush.msra.mxu0 %v604
      %740 = vmatpush.msra.mxu0 %v601
      %741 = vmatpush.msra.mxu0 %v598
      %742 = vmatpush.msra.mxu0 %v595
      %743 = vmatpush.msra.mxu0 %v592
      %744 = vmatpush.msra.mxu0 %v589
      %745 = vmatmul.f32.gmra.mxu0 %v703
      %v746 = vpop.f32.mrf.mxu0
      %v747 = vadd.f32 %v676, %v746
      %748 = vmatmul.f32.gmra.mxu0 %v706
      %v749 = vpop.f32.mrf.mxu0
      %v750 = vadd.f32 %v679, %v749
      %751 = vmatmul.f32.gmra.mxu0 %v709
      %v752 = vpop.f32.mrf.mxu0
      %v753 = vadd.f32 %v682, %v752
      %754 = vmatmul.f32.gmra.mxu0 %v712
      %v755 = vpop.f32.mrf.mxu0
      %v756 = vadd.f32 %v685, %v755
      %757 = vmatmul.f32.gmra.mxu0 %v715
      %v758 = vpop.f32.mrf.mxu0
      %v759 = vadd.f32 %v688, %v758
      %760 = vmatmul.f32.gmra.mxu0 %v718
      %v761 = vpop.f32.mrf.mxu0
      %v762 = vadd.f32 %v691, %v761
      %763 = vmatmul.f32.gmra.mxu0 %v721
      %v764 = vpop.f32.mrf.mxu0
      %v765 = vadd.f32 %v694, %v764
      %766 = vmatmul.f32.gmra.mxu0 %v724
      %v767 = vpop.f32.mrf.mxu0
      %v768 = vadd.f32 %v697, %v767
      %769 = vmatmul.f32.gmra.mxu0 %v727
      %v770 = vpop.f32.mrf.mxu0
      %v771 = vadd.f32 %v700, %v770
      %772 = vdwg.mxu0
      %s773 = scalar_lea.vmem %s2, 72
      %v774 = vld [vmem:[%s773] sm:$0xff]
      %v775 = vld [vmem:[%s773 + $0x8] sm:$0xff]
      %v776 = vld [vmem:[%s773 + $0x10] sm:$0xff]
      %v777 = vld [vmem:[%s773 + $0x18] sm:$0xff]
      %v778 = vld [vmem:[%s773 + $0x20] sm:$0xff]
      %v779 = vld [vmem:[%s773 + $0x28] sm:$0xff]
      %v780 = vld [vmem:[%s773 + $0x30] sm:$0xff]
      %v781 = vld [vmem:[%s773 + $0x38] sm:$0xff]
      %v782 = vld [vmem:[%s773 + $0x40] sm:$0xff]
      %v784 = vsel %vm630, %v774, 0
      %v787 = vsel %vm630, %v775, 0
      %v790 = vsel %vm630, %v776, 0
      %v793 = vsel %vm630, %v777, 0
      %v796 = vsel %vm630, %v778, 0
      %v799 = vsel %vm630, %v779, 0
      %v802 = vsel %vm630, %v780, 0
      %v805 = vsel %vm630, %v781, 0
      %v808 = vsel %vm630, %v782, 0
      %810 = vmatpush.msra.mxu0 0.0
      %811 = vmatpush.msra.mxu0 0.0
      %812 = vmatpush.msra.mxu0 0.0
      %813 = vmatpush.msra.mxu0 0.0
      %814 = vmatpush.msra.mxu0 0.0
      %815 = vmatpush.msra.mxu0 0.0
      %816 = vmatpush.msra.mxu0 0.0
      %817 = vmatpush.msra.mxu0 0.0
      %818 = vmatpush.msra.mxu0 0.0
      %819 = vmatpush.msra.mxu0 0.0
      %820 = vmatpush.msra.mxu0 0.0
      %821 = vmatpush.msra.mxu0 0.0
      %822 = vmatpush.msra.mxu0 %v537
      %823 = vmatpush.msra.mxu0 %v534
      %824 = vmatpush.msra.mxu0 %v531
      %825 = vmatpush.msra.mxu0 %v528
      %826 = vmatmul.f32.gmra.mxu0 %v784
      %v827 = vpop.f32.mrf.mxu0
      %v828 = vadd.f32 0.0, %v827
      %829 = vmatmul.f32.gmra.mxu0 %v787
      %v830 = vpop.f32.mrf.mxu0
      %v831 = vadd.f32 0.0, %v830
      %832 = vmatmul.f32.gmra.mxu0 %v790
      %v833 = vpop.f32.mrf.mxu0
      %v834 = vadd.f32 0.0, %v833
      %835 = vmatmul.f32.gmra.mxu0 %v793
      %v836 = vpop.f32.mrf.mxu0
      %v837 = vadd.f32 0.0, %v836
      %838 = vmatmul.f32.gmra.mxu0 %v796
      %v839 = vpop.f32.mrf.mxu0
      %v840 = vadd.f32 0.0, %v839
      %841 = vmatmul.f32.gmra.mxu0 %v799
      %v842 = vpop.f32.mrf.mxu0
      %v843 = vadd.f32 0.0, %v842
      %844 = vmatmul.f32.gmra.mxu0 %v802
      %v845 = vpop.f32.mrf.mxu0
      %v846 = vadd.f32 0.0, %v845
      %847 = vmatmul.f32.gmra.mxu0 %v805
      %v848 = vpop.f32.mrf.mxu0
      %v849 = vadd.f32 0.0, %v848
      %850 = vmatmul.f32.gmra.mxu0 %v808
      %v851 = vpop.f32.mrf.mxu0
      %v852 = vadd.f32 0.0, %v851
      %853 = vdwg.mxu0
      %v854 = vadd.f32 %v747, %v828
      %v855 = vadd.f32 %v750, %v831
      %v856 = vadd.f32 %v753, %v834
      %v857 = vadd.f32 %v756, %v837
      %v858 = vadd.f32 %v759, %v840
      %v859 = vadd.f32 %v762, %v843
      %v860 = vadd.f32 %v765, %v846
      %v861 = vadd.f32 %v768, %v849
      %v862 = vadd.f32 %v771, %v852
      %v863 = vld [vmem:[%s6] sm:$0xff]
      %v864 = vld [vmem:[%s6 + $0x8] sm:$0xff]
      %v865 = vld [vmem:[%s6 + $0x10] sm:$0xff]
      %v866 = vld [vmem:[%s6 + $0x18] sm:$0xff]
      %v867 = vld [vmem:[%s6 + $0x20] sm:$0xff]
      %v868 = vld [vmem:[%s6 + $0x28] sm:$0xff]
      %v869 = vld [vmem:[%s6 + $0x30] sm:$0xff]
      %v870 = vld [vmem:[%s6 + $0x38] sm:$0xff]
      %v871 = vld [vmem:[%s6 + $0x40] sm:$0xff]
      %v872 = vadd.f32 %v854, %v863
      %v873 = vadd.f32 %v855, %v864
      %v874 = vadd.f32 %v856, %v865
      %v875 = vadd.f32 %v857, %v866
      %v876 = vadd.f32 %v858, %v867
      %v877 = vadd.f32 %v859, %v868
      %v878 = vadd.f32 %v860, %v869
      %v879 = vadd.f32 %v861, %v870
      %v880 = vadd.f32 %v862, %v871
      %881 = vst [vmem:[#allocation2] sm:$0xff] %v872
      %882 = vst [vmem:[#allocation2 + $0x8] sm:$0xff] %v873
      %883 = vst [vmem:[#allocation2 + $0x10] sm:$0xff] %v874
      %884 = vst [vmem:[#allocation2 + $0x18] sm:$0xff] %v875
      %885 = vst [vmem:[#allocation2 + $0x20] sm:$0xff] %v876
      %886 = vst [vmem:[#allocation2 + $0x28] sm:$0xff] %v877
      %887 = vst [vmem:[#allocation2 + $0x30] sm:$0xff] %v878
      %888 = vst [vmem:[#allocation2 + $0x38] sm:$0xff] %v879
      %889 = vst [vmem:[#allocation2 + $0x40] sm:$0xff] %v880
      %v890 = vld [vmem:[#allocation2] sm:$0xff]
      %v891 = vld [vmem:[#allocation2 + $0x8] sm:$0xff]
      %v892 = vld [vmem:[#allocation2 + $0x10] sm:$0xff]
      %v893 = vld [vmem:[#allocation2 + $0x18] sm:$0xff]
      %v894 = vld [vmem:[#allocation2 + $0x20] sm:$0xff]
      %v895 = vld [vmem:[#allocation2 + $0x28] sm:$0xff]
      %v896 = vld [vmem:[#allocation2 + $0x30] sm:$0xff]
      %v897 = vld [vmem:[#allocation2 + $0x38] sm:$0xff]
      %v898 = vld [vmem:[#allocation2 + $0x40] sm:$0x3f]
      %v899 = vld [vmem:[%s7] sm:$0xff]
      %v900 = vld [vmem:[%s7 + $0x8] sm:$0xff]
      %v901 = vld [vmem:[%s7 + $0x10] sm:$0xff]
      %v902 = vld [vmem:[%s7 + $0x18] sm:$0xff]
      %v903 = vld [vmem:[%s7 + $0x20] sm:$0xff]
      %v904 = vld [vmem:[%s7 + $0x28] sm:$0xff]
      %v905 = vld [vmem:[%s7 + $0x30] sm:$0xff]
      %v906 = vld [vmem:[%s7 + $0x38] sm:$0xff]
      %v907 = vld [vmem:[%s7 + $0x40] sm:$0xff]
      %v908 = vld [vmem:[%s7 + $0x48] sm:$0xff]
      %v909 = vld [vmem:[%s7 + $0x50] sm:$0xff]
      %v910 = vld [vmem:[%s7 + $0x58] sm:$0xff]
      %v911 = vld [vmem:[%s7 + $0x60] sm:$0xff]
      %v912 = vld [vmem:[%s7 + $0x68] sm:$0xff]
      %v913 = vld [vmem:[%s7 + $0x70] sm:$0xff]
      %v914 = vld [vmem:[%s7 + $0x78] sm:$0xff]
      %v915 = vld [vmem:[#allocation2 + $0x1] sm:$0xff]
      %v916 = vld [vmem:[#allocation2 + $0x9] sm:$0xff]
      %v917 = vld [vmem:[#allocation2 + $0x11] sm:$0xff]
      %v918 = vld [vmem:[#allocation2 + $0x19] sm:$0xff]
      %v919 = vld [vmem:[#allocation2 + $0x21] sm:$0xff]
      %v920 = vld [vmem:[#allocation2 + $0x29] sm:$0xff]
      %v921 = vld [vmem:[#allocation2 + $0x31] sm:$0xff]
      %v922 = vld [vmem:[#allocation2 + $0x39] sm:$0xff]
      %v923 = vld [vmem:[#allocation2 + $0x41] sm:$0x3f]
      %s924 = scalar_lea.vmem %s7, 128
      %v925 = vld [vmem:[%s924] sm:$0xff]
      %v926 = vld [vmem:[%s924 + $0x8] sm:$0xff]
      %v927 = vld [vmem:[%s924 + $0x10] sm:$0xff]
      %v928 = vld [vmem:[%s924 + $0x18] sm:$0xff]
      %v929 = vld [vmem:[%s924 + $0x20] sm:$0xff]
      %v930 = vld [vmem:[%s924 + $0x28] sm:$0xff]
      %v931 = vld [vmem:[%s924 + $0x30] sm:$0xff]
      %v932 = vld [vmem:[%s924 + $0x38] sm:$0xff]
      %v933 = vld [vmem:[%s924 + $0x40] sm:$0xff]
      %v934 = vld [vmem:[%s924 + $0x48] sm:$0xff]
      %v935 = vld [vmem:[%s924 + $0x50] sm:$0xff]
      %v936 = vld [vmem:[%s924 + $0x58] sm:$0xff]
      %v937 = vld [vmem:[%s924 + $0x60] sm:$0xff]
      %v938 = vld [vmem:[%s924 + $0x68] sm:$0xff]
      %v939 = vld [vmem:[%s924 + $0x70] sm:$0xff]
      %v940 = vld [vmem:[%s924 + $0x78] sm:$0xff]
      %941 = vmatpush.msra.mxu0 %v940
      %942 = vmatpush.msra.mxu0 %v939
      %943 = vmatpush.msra.mxu0 %v938
      %944 = vmatpush.msra.mxu0 %v937
      %945 = vmatpush.msra.mxu0 %v936
      %946 = vmatpush.msra.mxu0 %v935
      %947 = vmatpush.msra.mxu0 %v934
      %948 = vmatpush.msra.mxu0 %v933
      %949 = vmatpush.msra.mxu0 %v932
      %950 = vmatpush.msra.mxu0 %v931
      %951 = vmatpush.msra.mxu0 %v930
      %952 = vmatpush.msra.mxu0 %v929
      %953 = vmatpush.msra.mxu0 %v928
      %954 = vmatpush.msra.mxu0 %v927
      %955 = vmatpush.msra.mxu0 %v926
      %956 = vmatpush.msra.mxu0 %v925
      %957 = vmatmul.f32.gmra.mxu0 %v915
      %v958 = vpop.f32.mrf.mxu0
      %v959 = vadd.f32 0.0, %v958
      %960 = vmatmul.f32.gmra.mxu0 %v916
      %v961 = vpop.f32.mrf.mxu0
      %v962 = vadd.f32 0.0, %v961
      %963 = vmatmul.f32.gmra.mxu0 %v917
      %v964 = vpop.f32.mrf.mxu0
      %v965 = vadd.f32 0.0, %v964
      %966 = vmatmul.f32.gmra.mxu0 %v918
      %v967 = vpop.f32.mrf.mxu0
      %v968 = vadd.f32 0.0, %v967
      %969 = vmatmul.f32.gmra.mxu0 %v919
      %v970 = vpop.f32.mrf.mxu0
      %v971 = vadd.f32 0.0, %v970
      %972 = vmatmul.f32.gmra.mxu0 %v920
      %v973 = vpop.f32.mrf.mxu0
      %v974 = vadd.f32 0.0, %v973
      %975 = vmatmul.f32.gmra.mxu0 %v921
      %v976 = vpop.f32.mrf.mxu0
      %v977 = vadd.f32 0.0, %v976
      %978 = vmatmul.f32.gmra.mxu0 %v922
      %v979 = vpop.f32.mrf.mxu0
      %v980 = vadd.f32 0.0, %v979
      %981 = vmatmul.f32.gmra.mxu0 %v923
      %v982 = vpop.f32.mrf.mxu0
      %v983 = vadd.f32 0.0, %v982
      %984 = vdwg.mxu0
      %985 = vmatpush.msra.mxu0 %v914
      %986 = vmatpush.msra.mxu0 %v913
      %987 = vmatpush.msra.mxu0 %v912
      %988 = vmatpush.msra.mxu0 %v911
      %989 = vmatpush.msra.mxu0 %v910
      %990 = vmatpush.msra.mxu0 %v909
      %991 = vmatpush.msra.mxu0 %v908
      %992 = vmatpush.msra.mxu0 %v907
      %993 = vmatpush.msra.mxu0 %v906
      %994 = vmatpush.msra.mxu0 %v905
      %995 = vmatpush.msra.mxu0 %v904
      %996 = vmatpush.msra.mxu0 %v903
      %997 = vmatpush.msra.mxu0 %v902
      %998 = vmatpush.msra.mxu0 %v901
      %999 = vmatpush.msra.mxu0 %v900
      %1000 = vmatpush.msra.mxu0 %v899
      %1001 = vmatmul.f32.gmra.mxu0 %v890
      %v1002 = vpop.f32.mrf.mxu0
      %v1003 = vadd.f32 %v959, %v1002
      %1004 = vmatmul.f32.gmra.mxu0 %v891
      %v1005 = vpop.f32.mrf.mxu0
      %v1006 = vadd.f32 %v962, %v1005
      %1007 = vmatmul.f32.gmra.mxu0 %v892
      %v1008 = vpop.f32.mrf.mxu0
      %v1009 = vadd.f32 %v965, %v1008
      %1010 = vmatmul.f32.gmra.mxu0 %v893
      %v1011 = vpop.f32.mrf.mxu0
      %v1012 = vadd.f32 %v968, %v1011
      %1013 = vmatmul.f32.gmra.mxu0 %v894
      %v1014 = vpop.f32.mrf.mxu0
      %v1015 = vadd.f32 %v971, %v1014
      %1016 = vmatmul.f32.gmra.mxu0 %v895
      %v1017 = vpop.f32.mrf.mxu0
      %v1018 = vadd.f32 %v974, %v1017
      %1019 = vmatmul.f32.gmra.mxu0 %v896
      %v1020 = vpop.f32.mrf.mxu0
      %v1021 = vadd.f32 %v977, %v1020
      %1022 = vmatmul.f32.gmra.mxu0 %v897
      %v1023 = vpop.f32.mrf.mxu0
      %v1024 = vadd.f32 %v980, %v1023
      %1025 = vmatmul.f32.gmra.mxu0 %v898
      %v1026 = vpop.f32.mrf.mxu0
      %v1027 = vadd.f32 %v983, %v1026
      %1028 = vdwg.mxu0
      %v1029 = vld [vmem:[#allocation2 + $0x2] sm:$0xff]
      %v1030 = vld [vmem:[#allocation2 + $0xa] sm:$0xff]
      %v1031 = vld [vmem:[#allocation2 + $0x12] sm:$0xff]
      %v1032 = vld [vmem:[#allocation2 + $0x1a] sm:$0xff]
      %v1033 = vld [vmem:[#allocation2 + $0x22] sm:$0xff]
      %v1034 = vld [vmem:[#allocation2 + $0x2a] sm:$0xff]
      %v1035 = vld [vmem:[#allocation2 + $0x32] sm:$0xff]
      %v1036 = vld [vmem:[#allocation2 + $0x3a] sm:$0xff]
      %v1037 = vld [vmem:[#allocation2 + $0x42] sm:$0x3f]
      %s1038 = scalar_lea.vmem %s7, 256
      %v1039 = vld [vmem:[%s1038] sm:$0xff]
      %v1040 = vld [vmem:[%s1038 + $0x8] sm:$0xff]
      %v1041 = vld [vmem:[%s1038 + $0x10] sm:$0xff]
      %v1042 = vld [vmem:[%s1038 + $0x18] sm:$0xff]
      %v1043 = vld [vmem:[%s1038 + $0x20] sm:$0xff]
      %v1044 = vld [vmem:[%s1038 + $0x28] sm:$0xff]
      %v1045 = vld [vmem:[%s1038 + $0x30] sm:$0xff]
      %v1046 = vld [vmem:[%s1038 + $0x38] sm:$0xff]
      %v1047 = vld [vmem:[%s1038 + $0x40] sm:$0xff]
      %v1048 = vld [vmem:[%s1038 + $0x48] sm:$0xff]
      %v1049 = vld [vmem:[%s1038 + $0x50] sm:$0xff]
      %v1050 = vld [vmem:[%s1038 + $0x58] sm:$0xff]
      %v1051 = vld [vmem:[%s1038 + $0x60] sm:$0xff]
      %v1052 = vld [vmem:[%s1038 + $0x68] sm:$0xff]
      %v1053 = vld [vmem:[%s1038 + $0x70] sm:$0xff]
      %v1054 = vld [vmem:[%s1038 + $0x78] sm:$0xff]
      %1055 = vmatpush.msra.mxu0 %v1054
      %1056 = vmatpush.msra.mxu0 %v1053
      %1057 = vmatpush.msra.mxu0 %v1052
      %1058 = vmatpush.msra.mxu0 %v1051
      %1059 = vmatpush.msra.mxu0 %v1050
      %1060 = vmatpush.msra.mxu0 %v1049
      %1061 = vmatpush.msra.mxu0 %v1048
      %1062 = vmatpush.msra.mxu0 %v1047
      %1063 = vmatpush.msra.mxu0 %v1046
      %1064 = vmatpush.msra.mxu0 %v1045
      %1065 = vmatpush.msra.mxu0 %v1044
      %1066 = vmatpush.msra.mxu0 %v1043
      %1067 = vmatpush.msra.mxu0 %v1042
      %1068 = vmatpush.msra.mxu0 %v1041
      %1069 = vmatpush.msra.mxu0 %v1040
      %1070 = vmatpush.msra.mxu0 %v1039
      %1071 = vmatmul.f32.gmra.mxu0 %v1029
      %v1072 = vpop.f32.mrf.mxu0
      %v1073 = vadd.f32 0.0, %v1072
      %1074 = vmatmul.f32.gmra.mxu0 %v1030
      %v1075 = vpop.f32.mrf.mxu0
      %v1076 = vadd.f32 0.0, %v1075
      %1077 = vmatmul.f32.gmra.mxu0 %v1031
      %v1078 = vpop.f32.mrf.mxu0
      %v1079 = vadd.f32 0.0, %v1078
      %1080 = vmatmul.f32.gmra.mxu0 %v1032
      %v1081 = vpop.f32.mrf.mxu0
      %v1082 = vadd.f32 0.0, %v1081
      %1083 = vmatmul.f32.gmra.mxu0 %v1033
      %v1084 = vpop.f32.mrf.mxu0
      %v1085 = vadd.f32 0.0, %v1084
      %1086 = vmatmul.f32.gmra.mxu0 %v1034
      %v1087 = vpop.f32.mrf.mxu0
      %v1088 = vadd.f32 0.0, %v1087
      %1089 = vmatmul.f32.gmra.mxu0 %v1035
      %v1090 = vpop.f32.mrf.mxu0
      %v1091 = vadd.f32 0.0, %v1090
      %1092 = vmatmul.f32.gmra.mxu0 %v1036
      %v1093 = vpop.f32.mrf.mxu0
      %v1094 = vadd.f32 0.0, %v1093
      %1095 = vmatmul.f32.gmra.mxu0 %v1037
      %v1096 = vpop.f32.mrf.mxu0
      %v1097 = vadd.f32 0.0, %v1096
      %1098 = vdwg.mxu0
      %v1099 = vadd.f32 %v1003, %v1073
      %v1100 = vadd.f32 %v1006, %v1076
      %v1101 = vadd.f32 %v1009, %v1079
      %v1102 = vadd.f32 %v1012, %v1082
      %v1103 = vadd.f32 %v1015, %v1085
      %v1104 = vadd.f32 %v1018, %v1088
      %v1105 = vadd.f32 %v1021, %v1091
      %v1106 = vadd.f32 %v1024, %v1094
      %v1107 = vadd.f32 %v1027, %v1097
      %v1108 = vld [vmem:[%s9] sm:$0x1]
      %v1109 = vperm.slane %v1108, 0
      %v1110 = vmul.f32 %v1099, %v1109
      %v1111 = vmul.f32 %v1100, %v1109
      %v1112 = vmul.f32 %v1101, %v1109
      %v1113 = vmul.f32 %v1102, %v1109
      %v1114 = vmul.f32 %v1103, %v1109
      %v1115 = vmul.f32 %v1104, %v1109
      %v1116 = vmul.f32 %v1105, %v1109
      %v1117 = vmul.f32 %v1106, %v1109
      %v1118 = vmul.f32 %v1107, %v1109
      %v1119 = vld [vmem:[%s9 + $0x1] sm:$0x1]
      %v1120 = vperm.slane %v1119, 0
      %v1121 = vadd.f32 %v1110, %v1120
      %v1122 = vadd.f32 %v1111, %v1120
      %v1123 = vadd.f32 %v1112, %v1120
      %v1124 = vadd.f32 %v1113, %v1120
      %v1125 = vadd.f32 %v1114, %v1120
      %v1126 = vadd.f32 %v1115, %v1120
      %v1127 = vadd.f32 %v1116, %v1120
      %v1128 = vadd.f32 %v1117, %v1120
      %v1129 = vadd.f32 %v1118, %v1120
      %v1130 = vmax.f32 %v1121, 0.0
      %v1131 = vmax.f32 %v1122, 0.0
      %v1132 = vmax.f32 %v1123, 0.0
      %v1133 = vmax.f32 %v1124, 0.0
      %v1134 = vmax.f32 %v1125, 0.0
      %v1135 = vmax.f32 %v1126, 0.0
      %v1136 = vmax.f32 %v1127, 0.0
      %v1137 = vmax.f32 %v1128, 0.0
      %v1138 = vmax.f32 %v1129, 0.0
      %v1139 = vld [vmem:[%s11] sm:$0xff]
      %v1140 = vld [vmem:[%s11 + $0x8] sm:$0xff]
      %v1141 = vld [vmem:[%s11 + $0x10] sm:$0xff]
      %v1142 = vld [vmem:[%s11 + $0x18] sm:$0xff]
      %v1143 = vld [vmem:[%s11 + $0x20] sm:$0xff]
      %v1144 = vld [vmem:[%s11 + $0x28] sm:$0xff]
      %v1145 = vld [vmem:[%s11 + $0x30] sm:$0xff]
      %v1146 = vld [vmem:[%s11 + $0x38] sm:$0xff]
      %v1147 = vld [vmem:[%s11 + $0x40] sm:$0x3f]
      %1149 = vset.pattern.permute.xlu0 0
      %1150 = vperm.xlu0 %1149, %v1139
      %v1151 = vpop.permute.xlu0 %1150
      %1154 = vset.pattern.permute.xlu0 0
      %1155 = vperm.xlu0 %1154, %v1140
      %v1156 = vpop.permute.xlu0 %1155
      %1159 = vset.pattern.permute.xlu0 0
      %1160 = vperm.xlu0 %1159, %v1141
      %v1161 = vpop.permute.xlu0 %1160
      %1164 = vset.pattern.permute.xlu0 0
      %1165 = vperm.xlu0 %1164, %v1142
      %v1166 = vpop.permute.xlu0 %1165
      %1169 = vset.pattern.permute.xlu0 0
      %1170 = vperm.xlu0 %1169, %v1143
      %v1171 = vpop.permute.xlu0 %1170
      %1174 = vset.pattern.permute.xlu0 0
      %1175 = vperm.xlu0 %1174, %v1144
      %v1176 = vpop.permute.xlu0 %1175
      %1179 = vset.pattern.permute.xlu0 0
      %1180 = vperm.xlu0 %1179, %v1145
      %v1181 = vpop.permute.xlu0 %1180
      %1184 = vset.pattern.permute.xlu0 0
      %1185 = vperm.xlu0 %1184, %v1146
      %v1186 = vpop.permute.xlu0 %1185
      %1189 = vset.pattern.permute.xlu0 0
      %1190 = vperm.xlu0 %1189, %v1147
      %v1191 = vpop.permute.xlu0 %1190
      %v1193 = vmul.f32 %v1130, %v1151
      %v1194 = vmul.f32 %v1131, %v1156
      %v1195 = vmul.f32 %v1132, %v1161
      %v1196 = vmul.f32 %v1133, %v1166
      %v1197 = vmul.f32 %v1134, %v1171
      %v1198 = vmul.f32 %v1135, %v1176
      %v1199 = vmul.f32 %v1136, %v1181
      %v1200 = vmul.f32 %v1137, %v1186
      %v1201 = vmul.f32 %v1138, %v1191
      %vm1202 = vcmask 516096
      %1203 = vst.msk [vmem:[#allocation3] sm:$0x1] %vm1202, 0.0
      %1204 = vst.msk [vmem:[#allocation3 + $0x47] sm:$0x1] %vm1202, 0.0
      %1205 = vst.msk [vmem:[#allocation3 + $0x1] sm:$0xff] %vm459, %v1193
      %1206 = vst.msk [vmem:[#allocation3 + $0x9] sm:$0xff] %vm459, %v1194
      %1207 = vst.msk [vmem:[#allocation3 + $0x11] sm:$0xff] %vm459, %v1195
      %1208 = vst.msk [vmem:[#allocation3 + $0x19] sm:$0xff] %vm459, %v1196
      %1209 = vst.msk [vmem:[#allocation3 + $0x21] sm:$0xff] %vm459, %v1197
      %1210 = vst.msk [vmem:[#allocation3 + $0x29] sm:$0xff] %vm459, %v1198
      %1211 = vst.msk [vmem:[#allocation3 + $0x31] sm:$0xff] %vm459, %v1199
      %1212 = vst.msk [vmem:[#allocation3 + $0x39] sm:$0xff] %vm459, %v1200
      %vm1213 = vcmask 521216
      %1214 = vst.msk [vmem:[#allocation3 + $0x41] sm:$0x3f] %vm1213, %v1201
      %v1215 = vld [vmem:[#allocation3] sm:$0xff]
      %v1216 = vld [vmem:[#allocation3 + $0x8] sm:$0xff]
      %v1217 = vld [vmem:[#allocation3 + $0x10] sm:$0xff]
      %v1218 = vld [vmem:[#allocation3 + $0x18] sm:$0xff]
      %v1219 = vld [vmem:[#allocation3 + $0x20] sm:$0xff]
      %v1220 = vld [vmem:[#allocation3 + $0x28] sm:$0xff]
      %v1221 = vld [vmem:[#allocation3 + $0x30] sm:$0xff]
      %v1222 = vld [vmem:[#allocation3 + $0x38] sm:$0xff]
      %v1223 = vld [vmem:[#allocation3 + $0x40] sm:$0x3f]
      %v1224 = vld [vmem:[%s8] sm:$0xff]
      %v1225 = vld [vmem:[%s8 + $0x8] sm:$0xff]
      %v1226 = vld [vmem:[%s8 + $0x10] sm:$0xff]
      %v1227 = vld [vmem:[%s8 + $0x18] sm:$0xff]
      %v1228 = vld [vmem:[%s8 + $0x20] sm:$0xff]
      %v1229 = vld [vmem:[%s8 + $0x28] sm:$0xff]
      %v1230 = vld [vmem:[%s8 + $0x30] sm:$0xff]
      %v1231 = vld [vmem:[%s8 + $0x38] sm:$0xff]
      %v1232 = vld [vmem:[#allocation3 + $0x1] sm:$0xff]
      %v1233 = vld [vmem:[#allocation3 + $0x9] sm:$0xff]
      %v1234 = vld [vmem:[#allocation3 + $0x11] sm:$0xff]
      %v1235 = vld [vmem:[#allocation3 + $0x19] sm:$0xff]
      %v1236 = vld [vmem:[#allocation3 + $0x21] sm:$0xff]
      %v1237 = vld [vmem:[#allocation3 + $0x29] sm:$0xff]
      %v1238 = vld [vmem:[#allocation3 + $0x31] sm:$0xff]
      %v1239 = vld [vmem:[#allocation3 + $0x39] sm:$0xff]
      %v1240 = vld [vmem:[#allocation3 + $0x41] sm:$0x3f]
      %s1241 = scalar_lea.vmem %s8, 64
      %v1242 = vld [vmem:[%s1241] sm:$0xff]
      %v1243 = vld [vmem:[%s1241 + $0x8] sm:$0xff]
      %v1244 = vld [vmem:[%s1241 + $0x10] sm:$0xff]
      %v1245 = vld [vmem:[%s1241 + $0x18] sm:$0xff]
      %v1246 = vld [vmem:[%s1241 + $0x20] sm:$0xff]
      %v1247 = vld [vmem:[%s1241 + $0x28] sm:$0xff]
      %v1248 = vld [vmem:[%s1241 + $0x30] sm:$0xff]
      %v1249 = vld [vmem:[%s1241 + $0x38] sm:$0xff]
      %v1251 = vsel %vm459, %v1232, 0
      %v1254 = vsel %vm459, %v1233, 0
      %v1257 = vsel %vm459, %v1234, 0
      %v1260 = vsel %vm459, %v1235, 0
      %v1263 = vsel %vm459, %v1236, 0
      %v1266 = vsel %vm459, %v1237, 0
      %v1269 = vsel %vm459, %v1238, 0
      %v1272 = vsel %vm459, %v1239, 0
      %v1275 = vsel %vm459, %v1240, 0
      %1277 = vmatpush.msra.mxu0 0.0
      %1278 = vmatpush.msra.mxu0 0.0
      %1279 = vmatpush.msra.mxu0 0.0
      %1280 = vmatpush.msra.mxu0 0.0
      %1281 = vmatpush.msra.mxu0 0.0
      %1282 = vmatpush.msra.mxu0 0.0
      %1283 = vmatpush.msra.mxu0 0.0
      %1284 = vmatpush.msra.mxu0 0.0
      %1285 = vmatpush.msra.mxu0 %v1249
      %1286 = vmatpush.msra.mxu0 %v1248
      %1287 = vmatpush.msra.mxu0 %v1247
      %1288 = vmatpush.msra.mxu0 %v1246
      %1289 = vmatpush.msra.mxu0 %v1245
      %1290 = vmatpush.msra.mxu0 %v1244
      %1291 = vmatpush.msra.mxu0 %v1243
      %1292 = vmatpush.msra.mxu0 %v1242
      %1293 = vmatmul.f32.gmra.mxu0 %v1251
      %v1294 = vpop.f32.mrf.mxu0
      %v1295 = vadd.f32 0.0, %v1294
      %1296 = vmatmul.f32.gmra.mxu0 %v1254
      %v1297 = vpop.f32.mrf.mxu0
      %v1298 = vadd.f32 0.0, %v1297
      %1299 = vmatmul.f32.gmra.mxu0 %v1257
      %v1300 = vpop.f32.mrf.mxu0
      %v1301 = vadd.f32 0.0, %v1300
      %1302 = vmatmul.f32.gmra.mxu0 %v1260
      %v1303 = vpop.f32.mrf.mxu0
      %v1304 = vadd.f32 0.0, %v1303
      %1305 = vmatmul.f32.gmra.mxu0 %v1263
      %v1306 = vpop.f32.mrf.mxu0
      %v1307 = vadd.f32 0.0, %v1306
      %1308 = vmatmul.f32.gmra.mxu0 %v1266
      %v1309 = vpop.f32.mrf.mxu0
      %v1310 = vadd.f32 0.0, %v1309
      %1311 = vmatmul.f32.gmra.mxu0 %v1269
      %v1312 = vpop.f32.mrf.mxu0
      %v1313 = vadd.f32 0.0, %v1312
      %1314 = vmatmul.f32.gmra.mxu0 %v1272
      %v1315 = vpop.f32.mrf.mxu0
      %v1316 = vadd.f32 0.0, %v1315
      %1317 = vmatmul.f32.gmra.mxu0 %v1275
      %v1318 = vpop.f32.mrf.mxu0
      %v1319 = vadd.f32 0.0, %v1318
      %1320 = vdwg.mxu0
      %v1322 = vsel %vm459, %v1215, 0
      %v1325 = vsel %vm459, %v1216, 0
      %v1328 = vsel %vm459, %v1217, 0
      %v1331 = vsel %vm459, %v1218, 0
      %v1334 = vsel %vm459, %v1219, 0
      %v1337 = vsel %vm459, %v1220, 0
      %v1340 = vsel %vm459, %v1221, 0
      %v1343 = vsel %vm459, %v1222, 0
      %v1346 = vsel %vm459, %v1223, 0
      %1348 = vmatpush.msra.mxu0 0.0
      %1349 = vmatpush.msra.mxu0 0.0
      %1350 = vmatpush.msra.mxu0 0.0
      %1351 = vmatpush.msra.mxu0 0.0
      %1352 = vmatpush.msra.mxu0 0.0
      %1353 = vmatpush.msra.mxu0 0.0
      %1354 = vmatpush.msra.mxu0 0.0
      %1355 = vmatpush.msra.mxu0 0.0
      %1356 = vmatpush.msra.mxu0 %v1231
      %1357 = vmatpush.msra.mxu0 %v1230
      %1358 = vmatpush.msra.mxu0 %v1229
      %1359 = vmatpush.msra.mxu0 %v1228
      %1360 = vmatpush.msra.mxu0 %v1227
      %1361 = vmatpush.msra.mxu0 %v1226
      %1362 = vmatpush.msra.mxu0 %v1225
      %1363 = vmatpush.msra.mxu0 %v1224
      %1364 = vmatmul.f32.gmra.mxu0 %v1322
      %v1365 = vpop.f32.mrf.mxu0
      %v1366 = vadd.f32 %v1295, %v1365
      %1367 = vmatmul.f32.gmra.mxu0 %v1325
      %v1368 = vpop.f32.mrf.mxu0
      %v1369 = vadd.f32 %v1298, %v1368
      %1370 = vmatmul.f32.gmra.mxu0 %v1328
      %v1371 = vpop.f32.mrf.mxu0
      %v1372 = vadd.f32 %v1301, %v1371
      %1373 = vmatmul.f32.gmra.mxu0 %v1331
      %v1374 = vpop.f32.mrf.mxu0
      %v1375 = vadd.f32 %v1304, %v1374
      %1376 = vmatmul.f32.gmra.mxu0 %v1334
      %v1377 = vpop.f32.mrf.mxu0
      %v1378 = vadd.f32 %v1307, %v1377
      %1379 = vmatmul.f32.gmra.mxu0 %v1337
      %v1380 = vpop.f32.mrf.mxu0
      %v1381 = vadd.f32 %v1310, %v1380
      %1382 = vmatmul.f32.gmra.mxu0 %v1340
      %v1383 = vpop.f32.mrf.mxu0
      %v1384 = vadd.f32 %v1313, %v1383
      %1385 = vmatmul.f32.gmra.mxu0 %v1343
      %v1386 = vpop.f32.mrf.mxu0
      %v1387 = vadd.f32 %v1316, %v1386
      %1388 = vmatmul.f32.gmra.mxu0 %v1346
      %v1389 = vpop.f32.mrf.mxu0
      %v1390 = vadd.f32 %v1319, %v1389
      %1391 = vdwg.mxu0
      %v1392 = vld [vmem:[#allocation3 + $0x2] sm:$0xff]
      %v1393 = vld [vmem:[#allocation3 + $0xa] sm:$0xff]
      %v1394 = vld [vmem:[#allocation3 + $0x12] sm:$0xff]
      %v1395 = vld [vmem:[#allocation3 + $0x1a] sm:$0xff]
      %v1396 = vld [vmem:[#allocation3 + $0x22] sm:$0xff]
      %v1397 = vld [vmem:[#allocation3 + $0x2a] sm:$0xff]
      %v1398 = vld [vmem:[#allocation3 + $0x32] sm:$0xff]
      %v1399 = vld [vmem:[#allocation3 + $0x3a] sm:$0xff]
      %v1400 = vld [vmem:[#allocation3 + $0x42] sm:$0x3f]
      %s1401 = scalar_lea.vmem %s8, 128
      %v1402 = vld [vmem:[%s1401] sm:$0xff]
      %v1403 = vld [vmem:[%s1401 + $0x8] sm:$0xff]
      %v1404 = vld [vmem:[%s1401 + $0x10] sm:$0xff]
      %v1405 = vld [vmem:[%s1401 + $0x18] sm:$0xff]
      %v1406 = vld [vmem:[%s1401 + $0x20] sm:$0xff]
      %v1407 = vld [vmem:[%s1401 + $0x28] sm:$0xff]
      %v1408 = vld [vmem:[%s1401 + $0x30] sm:$0xff]
      %v1409 = vld [vmem:[%s1401 + $0x38] sm:$0xff]
      %v1411 = vsel %vm459, %v1392, 0
      %v1414 = vsel %vm459, %v1393, 0
      %v1417 = vsel %vm459, %v1394, 0
      %v1420 = vsel %vm459, %v1395, 0
      %v1423 = vsel %vm459, %v1396, 0
      %v1426 = vsel %vm459, %v1397, 0
      %v1429 = vsel %vm459, %v1398, 0
      %v1432 = vsel %vm459, %v1399, 0
      %v1435 = vsel %vm459, %v1400, 0
      %1437 = vmatpush.msra.mxu0 0.0
      %1438 = vmatpush.msra.mxu0 0.0
      %1439 = vmatpush.msra.mxu0 0.0
      %1440 = vmatpush.msra.mxu0 0.0
      %1441 = vmatpush.msra.mxu0 0.0
      %1442 = vmatpush.msra.mxu0 0.0
      %1443 = vmatpush.msra.mxu0 0.0
      %1444 = vmatpush.msra.mxu0 0.0
      %1445 = vmatpush.msra.mxu0 %v1409
      %1446 = vmatpush.msra.mxu0 %v1408
      %1447 = vmatpush.msra.mxu0 %v1407
      %1448 = vmatpush.msra.mxu0 %v1406
      %1449 = vmatpush.msra.mxu0 %v1405
      %1450 = vmatpush.msra.mxu0 %v1404
      %1451 = vmatpush.msra.mxu0 %v1403
      %1452 = vmatpush.msra.mxu0 %v1402
      %1453 = vmatmul.f32.gmra.mxu0 %v1411
      %v1454 = vpop.f32.mrf.mxu0
      %v1455 = vadd.f32 0.0, %v1454
      %1456 = vmatmul.f32.gmra.mxu0 %v1414
      %v1457 = vpop.f32.mrf.mxu0
      %v1458 = vadd.f32 0.0, %v1457
      %1459 = vmatmul.f32.gmra.mxu0 %v1417
      %v1460 = vpop.f32.mrf.mxu0
      %v1461 = vadd.f32 0.0, %v1460
      %1462 = vmatmul.f32.gmra.mxu0 %v1420
      %v1463 = vpop.f32.mrf.mxu0
      %v1464 = vadd.f32 0.0, %v1463
      %1465 = vmatmul.f32.gmra.mxu0 %v1423
      %v1466 = vpop.f32.mrf.mxu0
      %v1467 = vadd.f32 0.0, %v1466
      %1468 = vmatmul.f32.gmra.mxu0 %v1426
      %v1469 = vpop.f32.mrf.mxu0
      %v1470 = vadd.f32 0.0, %v1469
      %1471 = vmatmul.f32.gmra.mxu0 %v1429
      %v1472 = vpop.f32.mrf.mxu0
      %v1473 = vadd.f32 0.0, %v1472
      %1474 = vmatmul.f32.gmra.mxu0 %v1432
      %v1475 = vpop.f32.mrf.mxu0
      %v1476 = vadd.f32 0.0, %v1475
      %1477 = vmatmul.f32.gmra.mxu0 %v1435
      %v1478 = vpop.f32.mrf.mxu0
      %v1479 = vadd.f32 0.0, %v1478
      %1480 = vdwg.mxu0
      %v1481 = vadd.f32 %v1366, %v1455
      %v1482 = vadd.f32 %v1369, %v1458
      %v1483 = vadd.f32 %v1372, %v1461
      %v1484 = vadd.f32 %v1375, %v1464
      %v1485 = vadd.f32 %v1378, %v1467
      %v1486 = vadd.f32 %v1381, %v1470
      %v1487 = vadd.f32 %v1384, %v1473
      %v1488 = vadd.f32 %v1387, %v1476
      %v1489 = vadd.f32 %v1390, %v1479
      %v1490 = vld [vmem:[%s10] sm:$0x1]
      %v1491 = vperm.slane %v1490, 0
      %v1492 = vmul.f32 %v1481, %v1491
      %v1493 = vmul.f32 %v1482, %v1491
      %v1494 = vmul.f32 %v1483, %v1491
      %v1495 = vmul.f32 %v1484, %v1491
      %v1496 = vmul.f32 %v1485, %v1491
      %v1497 = vmul.f32 %v1486, %v1491
      %v1498 = vmul.f32 %v1487, %v1491
      %v1499 = vmul.f32 %v1488, %v1491
      %v1500 = vmul.f32 %v1489, %v1491
      %v1501 = vld [vmem:[%s10 + $0x1] sm:$0x1]
      %v1502 = vperm.slane %v1501, 0
      %v1503 = vadd.f32 %v1492, %v1502
      %v1504 = vadd.f32 %v1493, %v1502
      %v1505 = vadd.f32 %v1494, %v1502
      %v1506 = vadd.f32 %v1495, %v1502
      %v1507 = vadd.f32 %v1496, %v1502
      %v1508 = vadd.f32 %v1497, %v1502
      %v1509 = vadd.f32 %v1498, %v1502
      %v1510 = vadd.f32 %v1499, %v1502
      %v1511 = vadd.f32 %v1500, %v1502
      %v1512 = vmax.f32 %v1503, 0.0
      %v1513 = vmax.f32 %v1504, 0.0
      %v1514 = vmax.f32 %v1505, 0.0
      %v1515 = vmax.f32 %v1506, 0.0
      %v1516 = vmax.f32 %v1507, 0.0
      %v1517 = vmax.f32 %v1508, 0.0
      %v1518 = vmax.f32 %v1509, 0.0
      %v1519 = vmax.f32 %v1510, 0.0
      %v1520 = vmax.f32 %v1511, 0.0
      %1521 = vst.msk [vmem:[%s437] sm:$0xff] %vm459, %v1512
      %1522 = vst.msk [vmem:[%s437 + $0x8] sm:$0xff] %vm459, %v1513
      %1523 = vst.msk [vmem:[%s437 + $0x10] sm:$0xff] %vm459, %v1514
      %1524 = vst.msk [vmem:[%s437 + $0x18] sm:$0xff] %vm459, %v1515
      %1525 = vst.msk [vmem:[%s437 + $0x20] sm:$0xff] %vm459, %v1516
      %1526 = vst.msk [vmem:[%s437 + $0x28] sm:$0xff] %vm459, %v1517
      %1527 = vst.msk [vmem:[%s437 + $0x30] sm:$0xff] %vm459, %v1518
      %1528 = vst.msk [vmem:[%s437 + $0x38] sm:$0xff] %vm459, %v1519
      %1529 = vst.msk [vmem:[%s437 + $0x40] sm:$0x3f] %vm1213, %v1520
      %vm1530 = vcmask 517120
      %1531 = vst.msk [vmem:[%s437 + $0x46] sm:$0x3] %vm1530, 0.0
      %s1532 = smul.u32 9, %s23
      %p1533 = scmp.lt.s32.totalorder %s1532, 17
      %s1534 = scalar_select %p1533, %s1532, 17
      %s1535 = smul.addr %s1534, 8
      %s1536 = scalar_lea.vmem %s12, %s1535
      // Predicated region
      $region69: #{up_forward.1} parent=67 // pred_check
        %p1537 = pneg %p303
      $region70: #{up_forward.1} parent=67 // pred_check_branch
        %1539 = sbr.rel (%p1537) target = $region72
      $region71: #{up_forward.1} parent=67 // pred_region
        %s1540 = smul.u32 9, %s23
      $region72: #{up_forward.1} parent=67 // pred_fallthru
        _
    $region68: #{up_forward.1} parent=5 // pred_fallthru
      _
    %p1541 = scmp.le.s32.totalorder 2, %s18
    // Predicated region
    $region73: #{up_forward.1} parent=5 // pred_check
      %p1542 = pneg %p1541
    $region74: #{up_forward.1} parent=5 // pred_check_branch
      %1544 = sbr.rel (%p1542) target = $region76
    $region75: #{up_forward.1} parent=5 // pred_region
      %s1545 = ssub.s32 %s18, 2
      // Predicated region
      $region77: #{up_forward.1} parent=75 // pred_check
        %p1546 = pneg %p309
      $region78: #{up_forward.1} parent=75 // pred_check_branch
        %1548 = sbr.rel (%p1546) target = $region80
      $region79: #{up_forward.1} parent=75 // pred_region
        %s1549 = smul.u32 9, %s24
        %p1550 = scmp.lt.s32.totalorder %s1549, 17
        %s1551 = scalar_select %p1550, %s1549, 17
        %s1552 = smul.addr %s1551, 8
        %s1553 = scalar_lea.vmem %s12, %s1552
      $region80: #{up_forward.1} parent=75 // pred_fallthru
        _
    $region76: #{up_forward.1} parent=5 // pred_fallthru
      _
  $region6: #{up_forward.1} parent=0 // loop_footer
    %s22 = sadd.s32 1, %s18
  $region7: #{up_forward.1} parent=0 // loop_footer_branch
    %17 = sbr.rel target = $region3
  $region8: #{up_forward.1} parent=0 // loop_exit
    _

</llo_original>
